<compile_context>
chip_gen: v5e
topology: v5e:2x2
jax: 0.10.0
libtpu: 0.0.40
codegen_flags: <defaults>
</compile_context>

<pallas_src>
import functools
import math

import jax
import jax.numpy as jnp
import numpy as np
from jax.experimental import pallas as pl
from jax.experimental.pallas import tpu as pltpu

_LANE = 128


# ----------------------------------------------------------------------------
# chip-aware configuration
# ----------------------------------------------------------------------------
def _detect_vmem_capacity():
    try:
        info = pltpu.get_tpu_info()
        for attr in ("vmem_capacity_bytes", "vmem_bytes", "vmem_size_bytes"):
            v = getattr(info, attr, None)
            if isinstance(v, int) and v > 0:
                return v
    except Exception:
        pass
    try:
        kind = jax.devices()[0].device_kind.lower()
        if "v2" in kind or "v3" in kind:
            return 16 << 20
        if "v7" in kind:
            return 64 << 20
        if any(t in kind for t in ("v4", "v5", "v6")):
            return 128 << 20
    except Exception:
        pass
    return 64 << 20


_VMEM_CAP = _detect_vmem_capacity()
_VMEM_LIMIT = min(_VMEM_CAP * 3 // 4, 100 << 20)   # ~48 MiB v7x, ~96 MiB v5e/v6e


def _dw_compute_dtype():
    # bf16 VPU exists on v6e/v7x; keep f32 depthwise math on older chips.
    try:
        kind = jax.devices()[0].device_kind.lower()
        if any(t in kind for t in ("v2", "v3", "v4", "v5")):
            return jnp.float32
    except Exception:
        pass
    return jnp.bfloat16


_DW_DTYPE = _dw_compute_dtype()


def _cparams(semantics):
    return pltpu.CompilerParams(dimension_semantics=semantics,
                                vmem_limit_bytes=_VMEM_LIMIT)


# ----------------------------------------------------------------------------
# helpers
# ----------------------------------------------------------------------------
def make_divisible(v, divisor=8):
    new_v = max(divisor, int(v + divisor / 2) // divisor * divisor)
    if new_v < 0.9 * v:
        new_v += divisor
    return new_v


def pad_ch(c):
    return ((c + _LANE - 1) // _LANE) * _LANE


def _apply_act(y, act):
    if act == "relu":
        return jnp.maximum(y, 0.0)
    if act == "hswish":
        return y * (jnp.clip(y + 3.0, 0.0, 6.0) * (1.0 / 6.0))
    if act == "hsigmoid":
        return jnp.clip(y + 3.0, 0.0, 6.0) * (1.0 / 6.0)
    return y  # identity


def _pick_tm(m, k, n, has_skip):
    """Largest M tile whose double-buffered working set fits the VMEM budget."""
    per_row = 2 * 2 * (k + n + (n if has_skip else 0))        # bf16, 2 buffers
    fixed = 2 * 2 * k * n                                      # weight copies
    budget = int(_VMEM_LIMIT * 0.55)
    tm = 2048
    while tm > 128 and tm * per_row + fixed > budget:
        tm //= 2
    if m <= tm:
        return m
    t = tm
    while t > 128 and m % t:
        t //= 2
    return t if m % t == 0 else tm


def _pick_th(ho, w2, tc, ssq, off):
    """Output-row tile for the depthwise conv (input block ~VMEM/10)."""
    budget = max(1 << 20, _VMEM_LIMIT // 10)
    th = ho
    while th > 8 and ssq * (th + off) * w2 * tc * 2 > budget:
        nxt = (th // 2 + 7) // 8 * 8
        if nxt >= th:
            break
        th = nxt
    return th


def _pick_hw_tile(hw, c):
    budget = 2 << 20
    t = hw
    while t > 8 and t * c * 2 > budget:
        nxt = (t // 2 + 7) // 8 * 8
        if nxt >= t:
            break
        t = nxt
    return t


# ----------------------------------------------------------------------------
# Pallas kernels
# ----------------------------------------------------------------------------
def _mm_kernel(act, has_gate, has_skip, x_ref, w_ref, sc_ref, sh_ref, *rest):
    # (1, tm, K) bf16 @ (K, N) bf16 -> f32 accum, fused BN affine + activation,
    # optional SE gate (per-batch, per-input-channel, applied in bf16) and
    # fused residual skip add.
    o_ref = rest[-1]
    extra = rest[:-1]
    xi = x_ref[0]                                        # (tm, K) bf16
    idx = 0
    if has_gate:
        g = extra[idx][0].astype(jnp.bfloat16)           # (1, K)
        idx += 1
        xi = xi * g                                      # bf16 multiply
    y = jnp.dot(xi, w_ref[...], preferred_element_type=jnp.float32)
    y = y * sc_ref[...] + sh_ref[...]                    # folded BN (f32)
    y = _apply_act(y, act)
    if has_skip:
        y = y + extra[idx][0].astype(jnp.float32)        # fused residual
    o_ref[...] = y[None].astype(o_ref.dtype)


def _dw_kernel(k, s, d, act, *refs):
    # phase refs: s*s windows, each (1, TH+off, W2, TC); taps are generated
    # with static in-VMEM slices; products in _DW_DTYPE, accumulation in f32.
    n_ph = s * s
    phase_refs = refs[:n_ph]
    w_ref, sc_ref, sh_ref, o_ref = refs[n_ph:n_ph + 4]
    th, wo = o_ref.shape[1], o_ref.shape[2]
    wv = w_ref[...]                                      # (k*k, TC)
    acc = None
    for u in range(k):
        for v in range(k):
            pr, ro = (u * d) % s, (u * d) // s
            pc, co = (v * d) % s, (v * d) // s
            tap = phase_refs[pr * s + pc][0, ro:ro + th, co:co + wo, :]
            t = (tap * wv[u * k + v]).astype(jnp.float32)
            acc = t if acc is None else acc + t
    y = acc * sc_ref[...] + sh_ref[...]
    o_ref[...] = _apply_act(y, act)[None].astype(o_ref.dtype)


def _se_kernel(hw, inv_hw, ragged,
               x_ref, w1_ref, b1_ref, w2_ref, b2_ref, g_ref, acc_ref):
    # Fused SE: tiled global-average-pool accumulation + FC1(relu) + FC2 +
    # hard-sigmoid; gate emitted as (1, 1, C) f32.
    j = pl.program_id(1)

    @pl.when(j == 0)
    def _():
        acc_ref[...] = jnp.zeros_like(acc_ref)

    xb = x_ref[...].astype(jnp.float32)
    if ragged:
        thw = x_ref.shape[1]
        rows = j * thw + jax.lax.broadcasted_iota(jnp.int32, (1, thw, 1), 1)
        xb = jnp.where(rows < hw, xb, 0.0)
    acc_ref[...] += jnp.sum(xb, axis=1)

    @pl.when(j == pl.num_programs(1) - 1)
    def _():
        pooled = acc_ref[...] * inv_hw                                   # (1,C)
        r = jnp.dot(pooled, w1_ref[...],
                    preferred_element_type=jnp.float32) + b1_ref[...]
        r = jnp.maximum(r, 0.0)
        g = jnp.dot(r, w2_ref[...],
                    preferred_element_type=jnp.float32) + b2_ref[...]
        g_ref[...] = (jnp.clip(g + 3.0, 0.0, 6.0) * (1.0 / 6.0))[None]


# ----------------------------------------------------------------------------
# Pallas wrappers
# ----------------------------------------------------------------------------
def fused_matmul(x, w, scale, shift, act, gate=None, skip=None, tm=None):
    """x (B, M, K) bf16 @ w (K, N) bf16 + fused BN/act [+ SE gate, + skip]."""
    b, m, kdim = x.shape
    n = w.shape[1]
    if tm is None:
        tm = _pick_tm(m, kdim, n, skip is not None)
    grid = (b, pl.cdiv(m, tm))
    in_specs = [
        pl.BlockSpec((1, tm, kdim), lambda i, j: (i, j, 0)),
        pl.BlockSpec((kdim, n), lambda i, j: (0, 0)),
        pl.BlockSpec((1, n), lambda i, j: (0, 0)),
        pl.BlockSpec((1, n), lambda i, j: (0, 0)),
    ]
    args = [x, w, scale.reshape(1, n), shift.reshape(1, n)]
    if gate is not None:
        in_specs.append(pl.BlockSpec((1, 1, kdim), lambda i, j: (i, 0, 0)))
        args.append(gate)
    if skip is not None:
        in_specs.append(pl.BlockSpec((1, tm, n), lambda i, j: (i, j, 0)))
        args.append(skip)
    kern = functools.partial(_mm_kernel, act, gate is not None, skip is not None)
    return pl.pallas_call(
        kern,
        grid=grid,
        in_specs=in_specs,
        out_specs=pl.BlockSpec((1, tm, n), lambda i, j: (i, j, 0)),
        out_shape=jax.ShapeDtypeStruct((b, m, n), jnp.bfloat16),
        compiler_params=_cparams(("parallel", "parallel")),
    )(*args)


def squeeze_excite_gate(x, p):
    """x (B, H, W, C) bf16 -> gate (B, 1, C) f32 via one fused SE kernel."""
    b, h, w, c = x.shape
    hw = h * w
    xf = x.reshape(b, hw, c)
    thw = _pick_hw_tile(hw, c)
    ragged = (hw % thw) != 0
    rd = p["w1"].shape[1]
    kern = functools.partial(_se_kernel, hw, 1.0 / hw, ragged)
    return pl.pallas_call(
        kern,
        grid=(b, pl.cdiv(hw, thw)),
        in_specs=[
            pl.BlockSpec((1, thw, c), lambda i, j: (i, j, 0)),
            pl.BlockSpec((c, rd), lambda i, j: (0, 0)),
            pl.BlockSpec((1, rd), lambda i, j: (0, 0)),
            pl.BlockSpec((rd, c), lambda i, j: (0, 0)),
            pl.BlockSpec((1, c), lambda i, j: (0, 0)),
        ],
        out_specs=pl.BlockSpec((1, 1, c), lambda i, j: (i, 0, 0)),
        out_shape=jax.ShapeDtypeStruct((b, 1, c), jnp.float32),
        scratch_shapes=[pltpu.VMEM((1, c), jnp.float32)],
        compiler_params=_cparams(("parallel", "arbitrary")),
    )(xf, p["w1"], p["b1"], p["w2"], p["b2"])


# ----------------------------------------------------------------------------
# JAX glue: TF "SAME" padding, stem im2col, dw phase/row-tile windows
# ----------------------------------------------------------------------------
def _tf_same_pad(x, k, s, d):
    n, h, w, c = x.shape
    eff = (k - 1) * d + 1

    def pads(size):
        out = -(-size // s)
        pad = max((out - 1) * s + eff - size, 0)
        return pad // 2, pad - pad // 2

    ph, pw = pads(h), pads(w)
    return jnp.pad(x, ((0, 0), ph, pw, (0, 0)))


# ----------------------------------------------------------------------------
# layer ops (NHWC; stages 2+ are channel-padded to multiples of 128)
# ----------------------------------------------------------------------------
def conv2d_full_bn_act(x, p, k, s, d, act):
    """Full conv (stem only) via bf16 im2col glue + one fused MXU matmul."""
    b, h, w, cin = x.shape
    ho, wo = -(-h // s), -(-w // s)
    xp = _tf_same_pad(x, k, s, d).astype(jnp.bfloat16)   # im2col built in bf16
    taps = [xp[:, u * d: u * d + (ho - 1) * s + 1: s,
               v * d: v * d + (wo - 1) * s + 1: s, :]
            for u in range(k) for v in range(k)]
    col = jnp.concatenate(taps, axis=-1).reshape(b, ho * wo, k * k * cin)
    y = fused_matmul(col, p["w"], p["scale"], p["shift"], act)
    return y.reshape(b, ho, wo, -1)


def conv1x1_bn_act(x, p, act, gate=None, skip=None):
    b, h, w, c = x.shape
    xf = x.reshape(b, h * w, c)
    sk = skip.reshape(b, h * w, skip.shape[-1]) if skip is not None else None
    y = fused_matmul(xf, p["w"], p["scale"], p["shift"], act, gate=gate, skip=sk)
    return y.reshape(b, h, w, -1)


def dwconv_bn_act(x, p, k, s, d, act, th=None):
    b, h, w, c = x.shape
    ho, wo = -(-h // s), -(-w // s)
    off = ((k - 1) * d) // s
    w2 = wo + off
    tc = min(c, _LANE)
    assert c % tc == 0
    if th is None:
        th = _pick_th(ho, w2, tc, s * s, off)
    th = min(th, ho)
    n_t = -(-ho // th)
    seg = th + off

    xp = _tf_same_pad(x, k, s, d).astype(jnp.bfloat16)
    # extra zero-pad so every (phase, row-tile) window is in-bounds; only
    # output rows >= Ho ever read the extra pad, and those are masked on store.
    need_h, need_w = (n_t * th + off) * s, w2 * s
    eh, ew = max(0, need_h - xp.shape[1]), max(0, need_w - xp.shape[2])
    if eh or ew:
        xp = jnp.pad(xp, ((0, 0), (0, eh), (0, ew), (0, 0)))

    phase_wins = []
    for pr in range(s):
        for pc in range(s):
            tiles = []
            for t in range(n_t):
                r0 = t * th * s + pr
                tiles.append(xp[:, r0: r0 + seg * s: s, pc: pc + w2 * s: s, :])
            win = jnp.stack(tiles, axis=1).reshape(b * n_t, seg, w2, c)
            phase_wins.append(win)

    nt_const = n_t

    def phase_map(i, t, j):
        return (i * nt_const + t, 0, 0, j)

    in_specs = [pl.BlockSpec((1, seg, w2, tc), phase_map) for _ in range(s * s)]
    in_specs += [
        pl.BlockSpec((k * k, tc), lambda i, t, j: (0, j)),
        pl.BlockSpec((1, tc), lambda i, t, j: (0, j)),
        pl.BlockSpec((1, tc), lambda i, t, j: (0, j)),
    ]
    args = phase_wins + [p["w"].astype(_DW_DTYPE),
                         p["scale"].reshape(1, c), p["shift"].reshape(1, c)]
    kern = functools.partial(_dw_kernel, k, s, d, act)
    return pl.pallas_call(
        kern,
        grid=(b, n_t, c // tc),
        in_specs=in_specs,
        out_specs=pl.BlockSpec((1, th, wo, tc), lambda i, t, j: (i, t, 0, j)),
        out_shape=jax.ShapeDtypeStruct((b, ho, wo, c), jnp.bfloat16),
        compiler_params=_cparams(("parallel", "parallel", "parallel")),
    )(*args)


# ----------------------------------------------------------------------------
# architecture (tf_mobilenetv3_large_100 after fastseg modifications:
# blocks[3][0] and blocks[5][0] stride -> 1; dw convs of blocks 3,4 dilation 2,
# blocks 5,6 dilation 4; tf trunk keeps Conv2dSame "SAME" padding).
# ----------------------------------------------------------------------------
STAGES = [
    [dict(type="ds", in_c=16, out_c=16, k=3, s=1, d=1, act="relu", se=False)],
    [dict(type="ir", in_c=16, mid_c=64, out_c=24, k=3, s=2, d=1, act="relu", se=False),
     dict(type="ir", in_c=24, mid_c=72, out_c=24, k=3, s=1, d=1, act="relu", se=False)],
    [dict(type="ir", in_c=24, mid_c=72, out_c=40, k=5, s=2, d=1, act="relu", se=True),
     dict(type="ir", in_c=40, mid_c=120, out_c=40, k=5, s=1, d=1, act="relu", se=True),
     dict(type="ir", in_c=40, mid_c=120, out_c=40, k=5, s=1, d=1, act="relu", se=True)],
    [dict(type="ir", in_c=40, mid_c=240, out_c=80, k=3, s=1, d=2, act="hswish", se=False),
     dict(type="ir", in_c=80, mid_c=200, out_c=80, k=3, s=1, d=2, act="hswish", se=False),
     dict(type="ir", in_c=80, mid_c=184, out_c=80, k=3, s=1, d=2, act="hswish", se=False),
     dict(type="ir", in_c=80, mid_c=184, out_c=80, k=3, s=1, d=2, act="hswish", se=False)],
    [dict(type="ir", in_c=80, mid_c=480, out_c=112, k=3, s=1, d=2, act="hswish", se=True),
     dict(type="ir", in_c=112, mid_c=672, out_c=112, k=3, s=1, d=2, act="hswish", se=True)],
    [dict(type="ir", in_c=112, mid_c=672, out_c=160, k=5, s=1, d=4, act="hswish", se=True),
     dict(type="ir", in_c=160, mid_c=960, out_c=160, k=5, s=1, d=4, act="hswish", se=True),
     dict(type="ir", in_c=160, mid_c=960, out_c=160, k=5, s=1, d=4, act="hswish", se=True)],
    [dict(type="cn", in_c=160, out_c=960, k=1, s=1, d=1, act="hswish", se=False)],
]


def _has_residual(cfg):
    return cfg["type"] != "cn" and cfg["in_c"] == cfg["out_c"] and cfg["s"] == 1


def _stage_padded(si):
    # stages 0-1 (highest resolution, 16/24/64/72 channels) keep true channel
    # counts; stages 2+ are 128-lane padded for lane-dense MXU work.
    return si >= 2


# ----------------------------------------------------------------------------
# deterministic synthetic parameters (BN folded; padded channels zeroed)
# ----------------------------------------------------------------------------
class ParamGen:
    def __init__(self, key):
        self._key = key

    def _next(self):
        self._key, sub = jax.random.split(self._key)
        return sub

    def _affine(self, c, dim):
        scale = jnp.zeros((dim,), jnp.float32).at[:c].set(
            1.0 + 0.05 * jax.random.normal(self._next(), (c,), jnp.float32))
        shift = jnp.zeros((dim,), jnp.float32).at[:c].set(
            0.05 * jax.random.normal(self._next(), (c,), jnp.float32))
        return scale, shift

    def conv_full(self, k, cin, cout, dim_out):
        kdim = k * k * cin
        w = jnp.zeros((kdim, dim_out), jnp.float32).at[:, :cout].set(
            jax.random.normal(self._next(), (kdim, cout), jnp.float32) / math.sqrt(kdim))
        scale, shift = self._affine(cout, dim_out)
        return {"w": w.astype(jnp.bfloat16), "scale": scale, "shift": shift}

    def conv1x1(self, cin, cout, dim_in, dim_out):
        w = jnp.zeros((dim_in, dim_out), jnp.float32).at[:cin, :cout].set(
            jax.random.normal(self._next(), (cin, cout), jnp.float32) / math.sqrt(cin))
        scale, shift = self._affine(cout, dim_out)
        return {"w": w.astype(jnp.bfloat16), "scale": scale, "shift": shift}

    def dwconv(self, k, c, dim):
        w = jnp.zeros((k * k, dim), jnp.float32).at[:, :c].set(
            jax.random.normal(self._next(), (k * k, c), jnp.float32) / float(k))
        scale, shift = self._affine(c, dim)
        return {"w": w, "scale": scale, "shift": shift}

    def se(self, c, rd, dim):
        w1 = jnp.zeros((dim, rd), jnp.float32).at[:c, :].set(
            jax.random.normal(self._next(), (c, rd), jnp.float32) / math.sqrt(c))
        b1 = jnp.zeros((1, rd), jnp.float32)
        w2 = jnp.zeros((rd, dim), jnp.float32).at[:, :c].set(
            jax.random.normal(self._next(), (rd, c), jnp.float32) / math.sqrt(rd))
        b2 = jnp.zeros((1, dim), jnp.float32)
        return {"w1": w1, "b1": b1, "w2": w2, "b2": b2}


def init_params(key):
    pg = ParamGen(key)
    params = {"stem": pg.conv_full(3, 3, 16, 16)}   # conv_stem 3x3 s2 + bn1 folded
    cur = 16                                        # running activation dim
    for si, stage in enumerate(STAGES):
        for bi, cfg in enumerate(stage):
            name = f"b{si}_{bi}"
            padded = _stage_padded(si)
            out_dim = pad_ch(cfg["out_c"]) if padded else cfg["out_c"]
            if cfg["type"] == "cn":
                params[name] = {"pw": pg.conv1x1(cfg["in_c"], cfg["out_c"], cur, out_dim)}
            elif cfg["type"] == "ds":
                params[name] = {
                    "dw": pg.dwconv(cfg["k"], cfg["in_c"], cur),
                    "pwl": pg.conv1x1(cfg["in_c"], cfg["out_c"], cur, out_dim),
                }
            else:
                mid_dim = pad_ch(cfg["mid_c"]) if padded else cfg["mid_c"]
                blk = {
                    "pw": pg.conv1x1(cfg["in_c"], cfg["mid_c"], cur, mid_dim),
                    "dw": pg.dwconv(cfg["k"], cfg["mid_c"], mid_dim),
                    "pwl": pg.conv1x1(cfg["mid_c"], cfg["out_c"], mid_dim, out_dim),
                }
                if cfg["se"]:
                    rd = make_divisible(cfg["mid_c"] * 0.25, 8)
                    blk["se"] = pg.se(cfg["mid_c"], rd, mid_dim)
                params[name] = blk
            cur = out_dim
    return params


# ----------------------------------------------------------------------------
# blocks + forward
# ----------------------------------------------------------------------------
def run_block(x, p, cfg):
    act = cfg["act"]
    if cfg["type"] == "cn":
        return conv1x1_bn_act(x, p["pw"], act)
    skip = x if _has_residual(cfg) else None
    if cfg["type"] == "ds":
        y = dwconv_bn_act(x, p["dw"], cfg["k"], cfg["s"], cfg["d"], act)
        return conv1x1_bn_act(y, p["pwl"], "none", skip=skip)
    # inverted residual
    y = conv1x1_bn_act(x, p["pw"], act)                                  # expand
    y = dwconv_bn_act(y, p["dw"], cfg["k"], cfg["s"], cfg["d"], act)
    gate = squeeze_excite_gate(y, p["se"]) if cfg["se"] else None
    return conv1x1_bn_act(y, p["pwl"], "none", gate=gate, skip=skip)     # project


def mobilenetv3_forward(params, x_nchw):
    # TODO(synk): the PyTorch forward does `print('Hello Nesma')`; host-side
    # debug print has no device equivalent and is omitted.
    x = jnp.transpose(x_nchw, (0, 2, 3, 1)).astype(jnp.float32)  # NCHW -> NHWC
    x = conv2d_full_bn_act(x, params["stem"], k=3, s=2, d=1, act="hswish")
    feats = {}
    for si, stage in enumerate(STAGES):
        for bi, cfg in enumerate(stage):
            x = run_block(x, params[f"b{si}_{bi}"], cfg)
        if si == 0:
            feats["s2"] = (x, 16)
        if si == 1:
            feats["s4"] = (x, 24)

    def to_nchw(t, c):
        return jnp.transpose(t[..., :c].astype(jnp.float32), (0, 3, 1, 2))

    return (to_nchw(*feats["s2"]), to_nchw(*feats["s4"]), to_nchw(x, 960))


# ----------------------------------------------------------------------------
# numerical self-tests for the riskiest kernels
# ----------------------------------------------------------------------------
def _ref_dwconv(x, p, k, s, d, act):
    c = x.shape[-1]
    rhs = p["w"].reshape(k, k, 1, c)
    y = jax.lax.conv_general_dilated(
        x.astype(jnp.float32), rhs, window_strides=(s, s), padding="SAME",
        rhs_dilation=(d, d), dimension_numbers=("NHWC", "HWIO", "NHWC"),
        feature_group_count=c)
    y = y * p["scale"] + p["shift"]
    return _apply_act(y, act)


def _self_test(key):
    # (1) depthwise conv: dilated stride-1 (forced row tiling) and k=5 s=2
    #     TF-SAME with odd spatial dims (partial output row tile).
    cases = [
        dict(k=3, s=1, d=2, c=128, h=24, w=20, act="hswish", th=8),
        dict(k=5, s=2, d=1, c=64, h=17, w=19, act="relu", th=8),
    ]
    for i, cs in enumerate(cases):
        kk = jax.random.fold_in(key, i)
        kx, kw, ksc, ksh = jax.random.split(kk, 4)
        x = jax.random.normal(kx, (2, cs["h"], cs["w"], cs["c"]),
                              jnp.float32).astype(jnp.bfloat16)
        p = {
            "w": jax.random.normal(kw, (cs["k"] ** 2, cs["c"]), jnp.float32) / cs["k"],
            "scale": 1.0 + 0.05 * jax.random.normal(ksc, (cs["c"],), jnp.float32),
            "shift": 0.05 * jax.random.normal(ksh, (cs["c"],), jnp.float32),
        }
        out = dwconv_bn_act(x, p, cs["k"], cs["s"], cs["d"], cs["act"], th=cs["th"])
        p_ref = dict(p, w=p["w"].astype(_DW_DTYPE).astype(jnp.float32))
        ref = _ref_dwconv(x, p_ref, cs["k"], cs["s"], cs["d"], cs["act"])
        np.testing.assert_allclose(np.asarray(out, np.float32),
                                   np.asarray(ref, np.float32),
                                   rtol=5e-2, atol=5e-2)

    # (2) fused matmul with SE gate + residual skip and a ragged M tile.
    kk = jax.random.fold_in(key, 100)
    kx, kw, ksc, ksh, kg, ks = jax.random.split(kk, 6)
    bsz, m, kd, n = 2, 200, 96, 48
    x = jax.random.normal(kx, (bsz, m, kd), jnp.float32).astype(jnp.bfloat16)
    wm = (jax.random.normal(kw, (kd, n), jnp.float32) / math.sqrt(kd)).astype(jnp.bfloat16)
    sc = 1.0 + 0.05 * jax.random.normal(ksc, (n,), jnp.float32)
    sh = 0.05 * jax.random.normal(ksh, (n,), jnp.float32)
    gate = jax.nn.sigmoid(jax.random.normal(kg, (bsz, 1, kd), jnp.float32))
    skip = jax.random.normal(ks, (bsz, m, n), jnp.float32).astype(jnp.bfloat16)
    out = fused_matmul(x, wm, sc, sh, "hswish", gate=gate, skip=skip, tm=128)
    gb = gate.astype(jnp.bfloat16).astype(jnp.float32)
    y = jnp.einsum("bmk,kn->bmn", x.astype(jnp.float32) * gb, wm.astype(jnp.float32))
    y = _apply_act(y * sc + sh, "hswish") + skip.astype(jnp.float32)
    np.testing.assert_allclose(np.asarray(out, np.float32),
                               np.asarray(y, np.float32),
                               rtol=5e-2, atol=5e-2)


# ----------------------------------------------------------------------------
if __name__ == "__main__":
    key = jax.random.PRNGKey(0)
    pkey, xkey, tkey = jax.random.split(key, 3)

    _self_test(tkey)                       # numerical checks of the new paths

    params = init_params(pkey)
    # small NCHW input (3 channels required by the stem conv)
    x = jax.random.normal(xkey, (2, 3, 32, 32), jnp.float32)

    fwd = jax.jit(mobilenetv3_forward)
    s2, s4, out = fwd(params, x)
    jax.block_until_ready((s2, s4, out))

    assert s2.shape == (2, 16, 16, 16), s2.shape     # 1/2 resolution, 16 ch
    assert s4.shape == (2, 24, 8, 8), s4.shape       # 1/4 resolution, 24 ch
    assert out.shape == (2, 960, 4, 4), out.shape    # 1/8 resolution (dilated), 960 ch
    assert bool(jnp.all(jnp.isfinite(s2))) and bool(jnp.all(jnp.isfinite(out)))
    print("KERNEL_OK")
</pallas_src>

<mosaic_0001>
module attributes {stable_mosaic.version = 11 : i64} {
  func.func @_dw_kernel(%arg0: i32, %arg1: i32, %arg2: i32, %arg3: memref<1x12x24x128xbf16, #tpu.memory_space<vmem>>, %arg4: memref<9x128xbf16, #tpu.memory_space<vmem>>, %arg5: memref<1x128xf32, #tpu.memory_space<vmem>>, %arg6: memref<1x128xf32, #tpu.memory_space<vmem>>, %arg7: memref<1x8x20x128xbf16, #tpu.memory_space<vmem>>) attributes {dimension_semantics = [#tpu.dimension_semantics<parallel>, #tpu.dimension_semantics<parallel>, #tpu.dimension_semantics<parallel>], iteration_bounds = array<i64: 2, 3, 1>, scalar_prefetch = 0 : i64, scratch_operands = 0 : i64, tpu.core_type = #tpu.core_type<tc>, window_params = [{transform_indices = @transform_0, window_bounds = array<i64: 1, 12, 24, 128>}, {transform_indices = @transform_1, window_bounds = array<i64: 9, 128>}, {transform_indices = @transform_2, window_bounds = array<i64: 1, 128>}, {transform_indices = @transform_3, window_bounds = array<i64: 1, 128>}, {transform_indices = @transform_4, window_bounds = array<i64: 1, 8, 20, 128>}]} {
    %c0 = arith.constant 0 : index
    %c0_0 = arith.constant 0 : index
    %0 = vector.load %arg4[%c0, %c0_0] : memref<9x128xbf16, #tpu.memory_space<vmem>>, vector<9x128xbf16>
    %c0_1 = arith.constant 0 : index
    %c0_2 = arith.constant 0 : index
    %c0_3 = arith.constant 0 : index
    %c0_4 = arith.constant 0 : index
    %1 = vector.load %arg3[%c0_1, %c0_2, %c0_3, %c0_4] : memref<1x12x24x128xbf16, #tpu.memory_space<vmem>>, vector<1x8x20x128xbf16>
    %2 = vector.shape_cast %1 : vector<1x8x20x128xbf16> to vector<8x20x128xbf16>
    %3 = vector.extract_strided_slice %0 {offsets = [0, 0], sizes = [1, 128], strides = [1, 1]} : vector<9x128xbf16> to vector<1x128xbf16>
    %4 = vector.shape_cast %3 : vector<1x128xbf16> to vector<128xbf16>
    %5 = vector.shape_cast %4 : vector<128xbf16> to vector<1x1x128xbf16>
    %6 = vector.broadcast %5 : vector<1x1x128xbf16> to vector<8x20x128xbf16>
    %7 = arith.mulf %2, %6 : vector<8x20x128xbf16>
    %8 = arith.extf %7 : vector<8x20x128xbf16> to vector<8x20x128xf32>
    %c0_5 = arith.constant 0 : index
    %c0_6 = arith.constant 0 : index
    %c2 = arith.constant 2 : index
    %c0_7 = arith.constant 0 : index
    %9 = vector.load %arg3[%c0_5, %c0_6, %c2, %c0_7] : memref<1x12x24x128xbf16, #tpu.memory_space<vmem>>, vector<1x8x20x128xbf16>
    %10 = vector.shape_cast %9 : vector<1x8x20x128xbf16> to vector<8x20x128xbf16>
    %11 = vector.extract_strided_slice %0 {offsets = [1, 0], sizes = [1, 128], strides = [1, 1]} : vector<9x128xbf16> to vector<1x128xbf16>
    %12 = vector.shape_cast %11 : vector<1x128xbf16> to vector<128xbf16>
    %13 = vector.shape_cast %12 : vector<128xbf16> to vector<1x1x128xbf16>
    %14 = vector.broadcast %13 : vector<1x1x128xbf16> to vector<8x20x128xbf16>
    %15 = arith.mulf %10, %14 : vector<8x20x128xbf16>
    %16 = arith.extf %15 : vector<8x20x128xbf16> to vector<8x20x128xf32>
    %17 = arith.addf %8, %16 : vector<8x20x128xf32>
    %c0_8 = arith.constant 0 : index
    %c0_9 = arith.constant 0 : index
    %c4 = arith.constant 4 : index
    %c0_10 = arith.constant 0 : index
    %18 = vector.load %arg3[%c0_8, %c0_9, %c4, %c0_10] : memref<1x12x24x128xbf16, #tpu.memory_space<vmem>>, vector<1x8x20x128xbf16>
    %19 = vector.shape_cast %18 : vector<1x8x20x128xbf16> to vector<8x20x128xbf16>
    %20 = vector.extract_strided_slice %0 {offsets = [2, 0], sizes = [1, 128], strides = [1, 1]} : vector<9x128xbf16> to vector<1x128xbf16>
    %21 = vector.shape_cast %20 : vector<1x128xbf16> to vector<128xbf16>
    %22 = vector.shape_cast %21 : vector<128xbf16> to vector<1x1x128xbf16>
    %23 = vector.broadcast %22 : vector<1x1x128xbf16> to vector<8x20x128xbf16>
    %24 = arith.mulf %19, %23 : vector<8x20x128xbf16>
    %25 = arith.extf %24 : vector<8x20x128xbf16> to vector<8x20x128xf32>
    %26 = arith.addf %17, %25 : vector<8x20x128xf32>
    %c0_11 = arith.constant 0 : index
    %c2_12 = arith.constant 2 : index
    %c0_13 = arith.constant 0 : index
    %c0_14 = arith.constant 0 : index
    %27 = vector.load %arg3[%c0_11, %c2_12, %c0_13, %c0_14] : memref<1x12x24x128xbf16, #tpu.memory_space<vmem>>, vector<1x8x20x128xbf16>
    %28 = vector.shape_cast %27 : vector<1x8x20x128xbf16> to vector<8x20x128xbf16>
    %29 = vector.extract_strided_slice %0 {offsets = [3, 0], sizes = [1, 128], strides = [1, 1]} : vector<9x128xbf16> to vector<1x128xbf16>
    %30 = vector.shape_cast %29 : vector<1x128xbf16> to vector<128xbf16>
    %31 = vector.shape_cast %30 : vector<128xbf16> to vector<1x1x128xbf16>
    %32 = vector.broadcast %31 : vector<1x1x128xbf16> to vector<8x20x128xbf16>
    %33 = arith.mulf %28, %32 : vector<8x20x128xbf16>
    %34 = arith.extf %33 : vector<8x20x128xbf16> to vector<8x20x128xf32>
    %35 = arith.addf %26, %34 : vector<8x20x128xf32>
    %c0_15 = arith.constant 0 : index
    %c2_16 = arith.constant 2 : index
    %c2_17 = arith.constant 2 : index
    %c0_18 = arith.constant 0 : index
    %36 = vector.load %arg3[%c0_15, %c2_16, %c2_17, %c0_18] : memref<1x12x24x128xbf16, #tpu.memory_space<vmem>>, vector<1x8x20x128xbf16>
    %37 = vector.shape_cast %36 : vector<1x8x20x128xbf16> to vector<8x20x128xbf16>
    %38 = vector.extract_strided_slice %0 {offsets = [4, 0], sizes = [1, 128], strides = [1, 1]} : vector<9x128xbf16> to vector<1x128xbf16>
    %39 = vector.shape_cast %38 : vector<1x128xbf16> to vector<128xbf16>
    %40 = vector.shape_cast %39 : vector<128xbf16> to vector<1x1x128xbf16>
    %41 = vector.broadcast %40 : vector<1x1x128xbf16> to vector<8x20x128xbf16>
    %42 = arith.mulf %37, %41 : vector<8x20x128xbf16>
    %43 = arith.extf %42 : vector<8x20x128xbf16> to vector<8x20x128xf32>
    %44 = arith.addf %35, %43 : vector<8x20x128xf32>
    %c0_19 = arith.constant 0 : index
    %c2_20 = arith.constant 2 : index
    %c4_21 = arith.constant 4 : index
    %c0_22 = arith.constant 0 : index
    %45 = vector.load %arg3[%c0_19, %c2_20, %c4_21, %c0_22] : memref<1x12x24x128xbf16, #tpu.memory_space<vmem>>, vector<1x8x20x128xbf16>
    %46 = vector.shape_cast %45 : vector<1x8x20x128xbf16> to vector<8x20x128xbf16>
    %47 = vector.extract_strided_slice %0 {offsets = [5, 0], sizes = [1, 128], strides = [1, 1]} : vector<9x128xbf16> to vector<1x128xbf16>
    %48 = vector.shape_cast %47 : vector<1x128xbf16> to vector<128xbf16>
    %49 = vector.shape_cast %48 : vector<128xbf16> to vector<1x1x128xbf16>
    %50 = vector.broadcast %49 : vector<1x1x128xbf16> to vector<8x20x128xbf16>
    %51 = arith.mulf %46, %50 : vector<8x20x128xbf16>
    %52 = arith.extf %51 : vector<8x20x128xbf16> to vector<8x20x128xf32>
    %53 = arith.addf %44, %52 : vector<8x20x128xf32>
    %c0_23 = arith.constant 0 : index
    %c4_24 = arith.constant 4 : index
    %c0_25 = arith.constant 0 : index
    %c0_26 = arith.constant 0 : index
    %54 = vector.load %arg3[%c0_23, %c4_24, %c0_25, %c0_26] : memref<1x12x24x128xbf16, #tpu.memory_space<vmem>>, vector<1x8x20x128xbf16>
    %55 = vector.shape_cast %54 : vector<1x8x20x128xbf16> to vector<8x20x128xbf16>
    %56 = vector.extract_strided_slice %0 {offsets = [6, 0], sizes = [1, 128], strides = [1, 1]} : vector<9x128xbf16> to vector<1x128xbf16>
    %57 = vector.shape_cast %56 : vector<1x128xbf16> to vector<128xbf16>
    %58 = vector.shape_cast %57 : vector<128xbf16> to vector<1x1x128xbf16>
    %59 = vector.broadcast %58 : vector<1x1x128xbf16> to vector<8x20x128xbf16>
    %60 = arith.mulf %55, %59 : vector<8x20x128xbf16>
    %61 = arith.extf %60 : vector<8x20x128xbf16> to vector<8x20x128xf32>
    %62 = arith.addf %53, %61 : vector<8x20x128xf32>
    %c0_27 = arith.constant 0 : index
    %c4_28 = arith.constant 4 : index
    %c2_29 = arith.constant 2 : index
    %c0_30 = arith.constant 0 : index
    %63 = vector.load %arg3[%c0_27, %c4_28, %c2_29, %c0_30] : memref<1x12x24x128xbf16, #tpu.memory_space<vmem>>, vector<1x8x20x128xbf16>
    %64 = vector.shape_cast %63 : vector<1x8x20x128xbf16> to vector<8x20x128xbf16>
    %65 = vector.extract_strided_slice %0 {offsets = [7, 0], sizes = [1, 128], strides = [1, 1]} : vector<9x128xbf16> to vector<1x128xbf16>
    %66 = vector.shape_cast %65 : vector<1x128xbf16> to vector<128xbf16>
    %67 = vector.shape_cast %66 : vector<128xbf16> to vector<1x1x128xbf16>
    %68 = vector.broadcast %67 : vector<1x1x128xbf16> to vector<8x20x128xbf16>
    %69 = arith.mulf %64, %68 : vector<8x20x128xbf16>
    %70 = arith.extf %69 : vector<8x20x128xbf16> to vector<8x20x128xf32>
    %71 = arith.addf %62, %70 : vector<8x20x128xf32>
    %c0_31 = arith.constant 0 : index
    %c4_32 = arith.constant 4 : index
    %c4_33 = arith.constant 4 : index
    %c0_34 = arith.constant 0 : index
    %72 = vector.load %arg3[%c0_31, %c4_32, %c4_33, %c0_34] : memref<1x12x24x128xbf16, #tpu.memory_space<vmem>>, vector<1x8x20x128xbf16>
    %73 = vector.shape_cast %72 : vector<1x8x20x128xbf16> to vector<8x20x128xbf16>
    %74 = vector.extract_strided_slice %0 {offsets = [8, 0], sizes = [1, 128], strides = [1, 1]} : vector<9x128xbf16> to vector<1x128xbf16>
    %75 = vector.shape_cast %74 : vector<1x128xbf16> to vector<128xbf16>
    %76 = vector.shape_cast %75 : vector<128xbf16> to vector<1x1x128xbf16>
    %77 = vector.broadcast %76 : vector<1x1x128xbf16> to vector<8x20x128xbf16>
    %78 = arith.mulf %73, %77 : vector<8x20x128xbf16>
    %79 = arith.extf %78 : vector<8x20x128xbf16> to vector<8x20x128xf32>
    %80 = arith.addf %71, %79 : vector<8x20x128xf32>
    %c0_35 = arith.constant 0 : index
    %c0_36 = arith.constant 0 : index
    %81 = vector.load %arg5[%c0_35, %c0_36] : memref<1x128xf32, #tpu.memory_space<vmem>>, vector<1x128xf32>
    %82 = vector.shape_cast %81 : vector<1x128xf32> to vector<1x1x128xf32>
    %83 = vector.broadcast %82 : vector<1x1x128xf32> to vector<8x20x128xf32>
    %84 = arith.mulf %80, %83 : vector<8x20x128xf32>
    %c0_37 = arith.constant 0 : index
    %c0_38 = arith.constant 0 : index
    %85 = vector.load %arg6[%c0_37, %c0_38] : memref<1x128xf32, #tpu.memory_space<vmem>>, vector<1x128xf32>
    %86 = vector.shape_cast %85 : vector<1x128xf32> to vector<1x1x128xf32>
    %87 = vector.broadcast %86 : vector<1x1x128xf32> to vector<8x20x128xf32>
    %88 = arith.addf %84, %87 : vector<8x20x128xf32>
    %cst = arith.constant 3.000000e+00 : f32
    %89 = vector.broadcast %cst : f32 to vector<8x20x128xf32>
    %90 = arith.addf %88, %89 : vector<8x20x128xf32>
    %cst_39 = arith.constant 0.000000e+00 : f32
    %cst_40 = arith.constant 6.000000e+00 : f32
    %91 = vector.broadcast %cst_39 : f32 to vector<8x20x128xf32>
    %92 = arith.maximumf %91, %90 : vector<8x20x128xf32>
    %93 = vector.broadcast %cst_40 : f32 to vector<8x20x128xf32>
    %94 = arith.minimumf %93, %92 : vector<8x20x128xf32>
    %cst_41 = arith.constant 0.166666672 : f32
    %95 = vector.broadcast %cst_41 : f32 to vector<8x20x128xf32>
    %96 = arith.mulf %94, %95 : vector<8x20x128xf32>
    %97 = arith.mulf %88, %96 : vector<8x20x128xf32>
    %98 = vector.shape_cast %97 : vector<8x20x128xf32> to vector<1x8x20x128xf32>
    %99 = arith.truncf %98 : vector<1x8x20x128xf32> to vector<1x8x20x128xbf16>
    %c0_42 = arith.constant 0 : index
    %c0_43 = arith.constant 0 : index
    %c0_44 = arith.constant 0 : index
    %c0_45 = arith.constant 0 : index
    %100 = vector.load %arg7[%c0_42, %c0_43, %c0_44, %c0_45] : memref<1x8x20x128xbf16, #tpu.memory_space<vmem>>, vector<1x8x20x128xbf16>
    tpu.vector_store %arg7[%c0_42, %c0_43, %c0_44, %c0_45], %99 {strides = array<i32>} : memref<1x8x20x128xbf16, #tpu.memory_space<vmem>>, vector<1x8x20x128xbf16>,
    return
  }
  func.func @transform_0(%arg0: i32, %arg1: i32, %arg2: i32) -> (i32, i32, i32, i32) {
    %c3_i32 = arith.constant 3 : i32
    %0 = arith.muli %arg0, %c3_i32 : i32
    %1 = arith.addi %0, %arg1 : i32
    %c0_i32 = arith.constant 0 : i32
    %c0_i32_0 = arith.constant 0 : i32
    %c0_i32_1 = arith.constant 0 : i32
    return %1, %c0_i32, %c0_i32_0, %arg2 : i32, i32, i32, i32
  }
  func.func @transform_1(%arg0: i32, %arg1: i32, %arg2: i32) -> (i32, i32) {
    %c0_i32 = arith.constant 0 : i32
    %c0_i32_0 = arith.constant 0 : i32
    return %c0_i32, %arg2 : i32, i32
  }
  func.func @transform_2(%arg0: i32, %arg1: i32, %arg2: i32) -> (i32, i32) {
    %c0_i32 = arith.constant 0 : i32
    %c0_i32_0 = arith.constant 0 : i32
    return %c0_i32, %arg2 : i32, i32
  }
  func.func @transform_3(%arg0: i32, %arg1: i32, %arg2: i32) -> (i32, i32) {
    %c0_i32 = arith.constant 0 : i32
    %c0_i32_0 = arith.constant 0 : i32
    return %c0_i32, %arg2 : i32, i32
  }
  func.func @transform_4(%arg0: i32, %arg1: i32, %arg2: i32) -> (i32, i32, i32, i32) {
    %c0_i32 = arith.constant 0 : i32
    %c0_i32_0 = arith.constant 0 : i32
    return %arg0, %arg1, %c0_i32, %arg2 : i32, i32, i32, i32
  }
}

</mosaic_0001>

<llo_original>
// kernel: tpu_custom_call.1
$region0: #{tpu_custom_call.1}
  #allocation0 [shape = 'u32[]', space=smem, size = 0x4, offset = 0x4, fixed_abs, tag = 'smem constant byte address 0x4 - core index']
  #allocation1 [shape = 'u32[72,128]{1,0:T(1,128)}', space=vmem, size = 0x9000, scoped, tag = 'internal scratch']
  %s0 = inlined_call_operand.hbm [shape: bf16[6,12,24,128], index: 0, kind: input, shape index: {}]
  %s1 = inlined_call_operand.hbm [shape: bf16[9,128], index: 1, kind: input, shape index: {}]
  %s2 = inlined_call_operand.vmem [shape: f32[1,128], index: 2, kind: input, shape index: {}]
  %s3 = inlined_call_operand.vmem [shape: f32[1,128], index: 3, kind: input, shape index: {}]
  %s4 = inlined_call_operand.vmem [shape: bf16[2,24,20,128], index: 4, kind: output, shape index: {}]
  %s5 = sld [smem:[#allocation0]]
  $region57: #{tpu_custom_call.1} parent=0
    _
  %s7 = ssub.s32 1, %s5
  %s8 = scalar_select 0, %s7, %s5
  $region1: #{tpu_custom_call.1} parent=0
    #allocation2 [shape = 'u8[147456]{0}', space=vmem, size = 0x24000, scoped, tag = 'input window, operand 0']
    #allocation3 [shape = 's32[2]{0}', space=sflag, size = 0x8, scoped, tag = 'scoped memory for tpu_custom_call.1']
    #allocation4 [shape = 'u8[4096]{0}', space=vmem, size = 0x1000, scoped, tag = 'input window, operand 1, single buffered']
    #allocation5 [shape = 's32[1]{0}', space=sflag, size = 0x4, scoped, tag = 'scoped memory for tpu_custom_call.1']
    %9 = vsyncpa [#allocation3], 0
    %s10 = scalar_lea.sflag [#allocation3], 1
    %11 = vsyncpa %s10, 0
    %12 = vsyncpa [#allocation5], 0
    loop: start=0, step=1, limit=8
    $region2: #{tpu_custom_call.1} parent=1 // loop_pre_header
      _
    $region3: #{tpu_custom_call.1} parent=1 // loop_header
      %s14 = sphi 0, %s18
      %p15 = scmp.ge.s32.totalorder %s14, 8
      %s21 = sphi 0, %s40
      %s22 = sphi 0, %s36
      %s23 = sphi 0, %s32
      %s24 = sphi 0, %s21
      %s25 = sphi 0, %s22
      %s26 = sphi 0, %s23
      %s27 = sphi 0, %s24
      %s28 = sphi 0, %s25
      %s29 = sphi 0, %s26
      %s49 = sphi 0, %s51
      %s52 = sphi 0, %s49
      %s53 = sphi 0, %s52
      %s69 = sphi 0, %s53
      %s75 = sphi 0, %s77
      %s78 = sphi 0, %s75
      %s79 = sphi 0, %s78
      %s95 = sphi 0, %s79
      %s101 = sphi 0, %s103
      %s104 = sphi 0, %s101
      %s105 = sphi 0, %s104
      %s121 = sphi 0, %s105
      %s127 = sphi 0, %s129
      %s130 = sphi 0, %s127
      %s131 = sphi 0, %s130
      %s147 = sphi 0, %s131
      %s157 = sphi 0, %s159
      %s160 = sphi 0, %s157
      %s161 = sphi 0, %s160
      %s177 = sphi 0, %s161
    $region4: #{tpu_custom_call.1} parent=1 // loop_header_branch
      %17 = sbr.rel (%p15) target = $region8
    $region5: #{tpu_custom_call.1} parent=1 // loop_body
      %s19 = ssub.s32 %s14, 1
      %s20 = ssub.s32 %s14, 2
      %s30 = sadd.s32 1, %s23
      %p31 = scmp.ge.s32.totalorder %s30, 1
      %s32 = scalar_select %p31, 0, %s30
      %s33 = sadd.s32 1, %s22
      %s34 = scalar_select %p31, %s33, %s22
      %p35 = scmp.ge.s32.totalorder %s34, 3
      %s36 = scalar_select %p35, 0, %s34
      %s37 = sadd.s32 1, %s21
      %s38 = scalar_select %p35, %s37, %s21
      %p39 = scmp.ge.s32.totalorder %s38, 2
      %s40 = scalar_select %p39, 0, %s38
      %s41 = smul.u32 %s21, 3
      %s42 = sadd.s32 %s41, %s22
      %s43 = smul.u32 %s40, 3
      %s44 = sadd.s32 %s43, %s36
      %s45 = ssub.s32 %s42, %s44
      %s46 = ssub.s32 %s23, %s32
      %s47 = sor.u32 %s45, %s46
      %p48 = scmp.eq.s32.totalorder %s47, 0
      %s50 = sadd.s32 %s49, 1
      %s51 = scalar_select %p48, %s49, %s50
      %p54 = pneg %p48
      %p55 = scmp.eq.s32.totalorder %s14, 5
      %p56 = por %p54, %p55
      %p57 = scmp.ne.s32.totalorder %s49, %s52
      %p58 = scmp.eq.s32.totalorder %s14, 0
      %p59 = por %p57, %p58
      %p60 = scmp.ne.s32.totalorder %s49, %s52
      %p61 = scmp.eq.s32.totalorder %s19, 5
      %p62 = por %p60, %p61
      %p63 = scmp.ne.s32.totalorder %s52, %s53
      %p64 = scmp.eq.s32.totalorder %s19, 0
      %p65 = por %p63, %p64
      %p66 = scmp.ne.s32.totalorder %s52, %s53
      %p67 = scmp.eq.s32.totalorder %s20, 5
      %p68 = por %p66, %p67
      %p70 = scmp.ne.s32.totalorder %s53, %s69
      %p71 = scmp.eq.s32.totalorder %s20, 0
      %p72 = por %p70, %p71
      %s73 = ssub.s32 %s23, %s32
      %p74 = scmp.eq.s32.totalorder %s73, 0
      %s76 = sadd.s32 %s75, 1
      %s77 = scalar_select %p74, %s75, %s76
      %p80 = pneg %p74
      %p81 = scmp.eq.s32.totalorder %s14, 5
      %p82 = por %p80, %p81
      %p83 = scmp.ne.s32.totalorder %s75, %s78
      %p84 = scmp.eq.s32.totalorder %s14, 0
      %p85 = por %p83, %p84
      %p86 = scmp.ne.s32.totalorder %s75, %s78
      %p87 = scmp.eq.s32.totalorder %s19, 5
      %p88 = por %p86, %p87
      %p89 = scmp.ne.s32.totalorder %s78, %s79
      %p90 = scmp.eq.s32.totalorder %s19, 0
      %p91 = por %p89, %p90
      %p92 = scmp.ne.s32.totalorder %s78, %s79
      %p93 = scmp.eq.s32.totalorder %s20, 5
      %p94 = por %p92, %p93
      %p96 = scmp.ne.s32.totalorder %s79, %s95
      %p97 = scmp.eq.s32.totalorder %s20, 0
      %p98 = por %p96, %p97
      %s99 = ssub.s32 %s23, %s32
      %p100 = scmp.eq.s32.totalorder %s99, 0
      %s102 = sadd.s32 %s101, 1
      %s103 = scalar_select %p100, %s101, %s102
      %p106 = pneg %p100
      %p107 = scmp.eq.s32.totalorder %s14, 5
      %p108 = por %p106, %p107
      %p109 = scmp.ne.s32.totalorder %s101, %s104
      %p110 = scmp.eq.s32.totalorder %s14, 0
      %p111 = por %p109, %p110
      %p112 = scmp.ne.s32.totalorder %s101, %s104
      %p113 = scmp.eq.s32.totalorder %s19, 5
      %p114 = por %p112, %p113
      %p115 = scmp.ne.s32.totalorder %s104, %s105
      %p116 = scmp.eq.s32.totalorder %s19, 0
      %p117 = por %p115, %p116
      %p118 = scmp.ne.s32.totalorder %s104, %s105
      %p119 = scmp.eq.s32.totalorder %s20, 5
      %p120 = por %p118, %p119
      %p122 = scmp.ne.s32.totalorder %s105, %s121
      %p123 = scmp.eq.s32.totalorder %s20, 0
      %p124 = por %p122, %p123
      %s125 = ssub.s32 %s23, %s32
      %p126 = scmp.eq.s32.totalorder %s125, 0
      %s128 = sadd.s32 %s127, 1
      %s129 = scalar_select %p126, %s127, %s128
      %p132 = pneg %p126
      %p133 = scmp.eq.s32.totalorder %s14, 5
      %p134 = por %p132, %p133
      %p135 = scmp.ne.s32.totalorder %s127, %s130
      %p136 = scmp.eq.s32.totalorder %s14, 0
      %p137 = por %p135, %p136
      %p138 = scmp.ne.s32.totalorder %s127, %s130
      %p139 = scmp.eq.s32.totalorder %s19, 5
      %p140 = por %p138, %p139
      %p141 = scmp.ne.s32.totalorder %s130, %s131
      %p142 = scmp.eq.s32.totalorder %s19, 0
      %p143 = por %p141, %p142
      %p144 = scmp.ne.s32.totalorder %s130, %s131
      %p145 = scmp.eq.s32.totalorder %s20, 5
      %p146 = por %p144, %p145
      %p148 = scmp.ne.s32.totalorder %s131, %s147
      %p149 = scmp.eq.s32.totalorder %s20, 0
      %p150 = por %p148, %p149
      %s151 = ssub.s32 %s21, %s40
      %s152 = ssub.s32 %s22, %s36
      %s153 = sor.u32 %s151, %s152
      %s154 = ssub.s32 %s23, %s32
      %s155 = sor.u32 %s153, %s154
      %p156 = scmp.eq.s32.totalorder %s155, 0
      %s158 = sadd.s32 %s157, 1
      %s159 = scalar_select %p156, %s157, %s158
      %p162 = pneg %p156
      %p163 = scmp.eq.s32.totalorder %s14, 5
      %p164 = por %p162, %p163
      %p165 = scmp.ne.s32.totalorder %s157, %s160
      %p166 = scmp.eq.s32.totalorder %s14, 0
      %p167 = por %p165, %p166
      %p168 = scmp.ne.s32.totalorder %s157, %s160
      %p169 = scmp.eq.s32.totalorder %s19, 5
      %p170 = por %p168, %p169
      %p171 = scmp.ne.s32.totalorder %s160, %s161
      %p172 = scmp.eq.s32.totalorder %s19, 0
      %p173 = por %p171, %p172
      %p174 = scmp.ne.s32.totalorder %s160, %s161
      %p175 = scmp.eq.s32.totalorder %s20, 5
      %p176 = por %p174, %p175
      %p178 = scmp.ne.s32.totalorder %s161, %s177
      %p179 = scmp.eq.s32.totalorder %s20, 0
      %p180 = por %p178, %p179
      %p181 = scmp.le.s32.totalorder 1, %s14
      %p182 = scmp.lt.s32.totalorder %s14, 7
      %p183 = pnand %p181, %p182
      %p184 = pneg %p183
      // Predicated region
      $region9: #{tpu_custom_call.1} parent=5 // pred_check
        _
      $region10: #{tpu_custom_call.1} parent=5 // pred_check_branch
        %186 = sbr.rel (%p183) target = $region12
      $region11: #{tpu_custom_call.1} parent=5 // pred_region
        %s187 = ssub.s32 %s14, 1
        // Predicated region
        $region13: #{tpu_custom_call.1} parent=11 // pred_check
          %p188 = pneg %p91
        $region14: #{tpu_custom_call.1} parent=11 // pred_check_branch
          %190 = sbr.rel (%p188) target = $region16
        $region15: #{tpu_custom_call.1} parent=11 // pred_region
          %192 = vsyncadd [#allocation5], 0
          %s193 = smul.addr %s26, 4
          %s194 = scalar_lea.hbm %s1, %s193
          %s195 = sshll.u32 %s194, 4
          %s196 = int_to_ptr.hbm [resolvable:$true] %s195
          %s197 = sshll.u32 [#allocation4], 4
          %s198 = int_to_ptr.vmem [resolvable:$true] %s197
          %203 = dma.hbm_to_vmem [thread:$0]  %s196, 128, %s198, [#allocation5], 64, 64, 4
        $region16: #{tpu_custom_call.1} parent=11 // pred_fallthru
          _
        // Predicated region
        $region17: #{tpu_custom_call.1} parent=11 // pred_check
          %p204 = pneg %p117
        $region18: #{tpu_custom_call.1} parent=11 // pred_check_branch
          %206 = sbr.rel (%p204) target = $region20
        $region19: #{tpu_custom_call.1} parent=11 // pred_region
          %p207 = scmp.lt.s32.totalorder %s26, 0
          %s208 = scalar_select %p207, %s26, 0
          %s209 = scalar_lea.vmem %s2, %s208
        $region20: #{tpu_custom_call.1} parent=11 // pred_fallthru
          _
        // Predicated region
        $region21: #{tpu_custom_call.1} parent=11 // pred_check
          %p210 = pneg %p143
        $region22: #{tpu_custom_call.1} parent=11 // pred_check_branch
          %212 = sbr.rel (%p210) target = $region24
        $region23: #{tpu_custom_call.1} parent=11 // pred_region
          %p213 = scmp.lt.s32.totalorder %s26, 0
          %s214 = scalar_select %p213, %s26, 0
          %s215 = scalar_lea.vmem %s3, %s214
        $region24: #{tpu_custom_call.1} parent=11 // pred_fallthru
          _
      $region12: #{tpu_custom_call.1} parent=5 // pred_fallthru
        _
      %p216 = scmp.lt.s32.totalorder %s14, 6
      // Predicated region
      $region25: #{tpu_custom_call.1} parent=5 // pred_check
        %p217 = pneg %p216
      $region26: #{tpu_custom_call.1} parent=5 // pred_check_branch
        %219 = sbr.rel (%p217) target = $region28
      $region27: #{tpu_custom_call.1} parent=5 // pred_region
        // Predicated region
        $region29: #{tpu_custom_call.1} parent=27 // pred_check
          %p220 = pneg %p59
        $region30: #{tpu_custom_call.1} parent=27 // pred_check_branch
          %222 = sbr.rel (%p220) target = $region32
        $region31: #{tpu_custom_call.1} parent=27 // pred_region
          %s223 = sand.u32 %s49, 1
          %s224 = scalar_lea.sflag [#allocation3], %s223
          %s225 = sand.u32 %s49, 1
          %s226 = smul.addr %s225, 144
          %s227 = scalar_lea.vmem [#allocation2], %s226
          %s228 = smul.u32 %s21, 3
          %s229 = sadd.s32 %s228, %s22
          %231 = vsyncadd %s224, 0
          %s232 = smul.addr %s229, 36
          %s233 = sadd.s32 %s23, %s232
          %s234 = smul.addr %s233, 4
          %s235 = scalar_lea.hbm %s0, %s234
          %s236 = sshll.u32 %s235, 4
          %s237 = int_to_ptr.hbm [resolvable:$true] %s236
          %s238 = sshll.u32 %s227, 4
          %s239 = int_to_ptr.vmem [resolvable:$true] %s238
          %244 = dma.hbm_to_vmem [thread:$0]  %s237, 2304, %s239, %s224, 64, 64, 4
        $region32: #{tpu_custom_call.1} parent=27 // pred_fallthru
          _
      $region28: #{tpu_custom_call.1} parent=5 // pred_fallthru
        _
      %p245 = scmp.le.s32.totalorder 1, %s14
      %p246 = scmp.lt.s32.totalorder %s14, 7
      %p247 = pnand %p245, %p246
      %p248 = pneg %p247
      // Predicated region
      $region33: #{tpu_custom_call.1} parent=5 // pred_check
        _
      $region34: #{tpu_custom_call.1} parent=5 // pred_check_branch
        %250 = sbr.rel (%p247) target = $region36
      $region35: #{tpu_custom_call.1} parent=5 // pred_region
        %s251 = ssub.s32 %s14, 1
        %s252 = sand.u32 %s52, 1
        %s253 = scalar_lea.sflag [#allocation3], %s252
        %s254 = sand.u32 %s52, 1
        %s255 = smul.addr %s254, 144
        %s256 = scalar_lea.vmem [#allocation2], %s255
        // Predicated region
        $region37: #{tpu_custom_call.1} parent=35 // pred_check
          %p257 = pneg %p65
        $region38: #{tpu_custom_call.1} parent=35 // pred_check_branch
          %259 = sbr.rel (%p257) target = $region40
        $region39: #{tpu_custom_call.1} parent=35 // pred_region
          %261 = dma.done %s253, 2304
        $region40: #{tpu_custom_call.1} parent=35 // pred_fallthru
          _
        // Predicated region
        $region41: #{tpu_custom_call.1} parent=35 // pred_check
          %p262 = pneg %p91
        $region42: #{tpu_custom_call.1} parent=35 // pred_check_branch
          %264 = sbr.rel (%p262) target = $region44
        $region43: #{tpu_custom_call.1} parent=35 // pred_region
          %266 = dma.done [#allocation5], 128
        $region44: #{tpu_custom_call.1} parent=35 // pred_fallthru
          _
        %s267 = sand.u32 %s52, 1
        %s268 = scalar_lea.sflag [#allocation3], %s267
        %s269 = sand.u32 %s52, 1
        %s270 = smul.addr %s269, 144
        %s271 = scalar_lea.vmem [#allocation2], %s270
        %p272 = pneg %p65
        %p273 = pneg %p62
        %p274 = pneg %p91
        %p275 = pneg %p88
        %p276 = scmp.lt.s32.totalorder %s26, 0
        %s277 = scalar_select %p276, %s26, 0
        %s278 = scalar_lea.vmem %s2, %s277
        %p279 = pneg %p117
        %p280 = pneg %p114
        %p281 = scmp.lt.s32.totalorder %s26, 0
        %s282 = scalar_select %p281, %s26, 0
        %s283 = scalar_lea.vmem %s3, %s282
        %p284 = pneg %p143
        %p285 = pneg %p140
        %p286 = pneg %p173
        %p287 = pneg %p170
        %s288 = smul.u32 8, %s25
        %p289 = scmp.lt.s32.totalorder %s24, 1
        %s290 = scalar_select %p289, %s24, 1
        %p291 = scmp.lt.s32.totalorder %s288, 23
        %s292 = scalar_select %p291, %s288, 23
        %p293 = scmp.lt.s32.totalorder %s26, 0
        %s294 = scalar_select %p293, %s26, 0
        %s295 = smul.addr %s292, 3
        %s296 = sadd.s32 %s294, %s295
        %s297 = smul.addr %s290, 72
        %s298 = sadd.s32 %s296, %s297
        %s299 = smul.addr %s298, 4
        %s300 = scalar_lea.vmem %s4, %s299
        %s301 = smul.u32 %s24, 3
        %s302 = sadd.s32 %s301, %s25
        %p303 = scmp.lt.s32.totalorder %s26, 0
        %s304 = scalar_select %p303, %s26, 0
        %s305 = scalar_lea.vmem %s2, %s304
        %p306 = scmp.lt.s32.totalorder %s26, 0
        %s307 = scalar_select %p306, %s26, 0
        %s308 = scalar_lea.vmem %s3, %s307
        %s309 = smul.u32 8, %s25
        %p310 = scmp.lt.s32.totalorder %s24, 1
        %s311 = scalar_select %p310, %s24, 1
        %p312 = scmp.lt.s32.totalorder %s309, 23
        %s313 = scalar_select %p312, %s309, 23
        %p314 = scmp.lt.s32.totalorder %s26, 0
        %s315 = scalar_select %p314, %s26, 0
        %s316 = smul.addr %s313, 3
        %s317 = sadd.s32 %s315, %s316
        %s318 = smul.addr %s311, 72
        %s319 = sadd.s32 %s317, %s318
        %s320 = smul.addr %s319, 4
        %s321 = scalar_lea.vmem %s4, %s320
        %s322 = smul.u32 8, %s25
        %v323 = vld [vmem:[#allocation4] sm:$0xf]
        %v324 = vld [vmem:[#allocation4 + $0x4] sm:$0x1]
        %v325 = vld [vmem:[%s256] sm:$0xf]
        %v326 = vld [vmem:[%s256 + $0x4] sm:$0xf]
        %v327 = vld [vmem:[%s256 + $0x8] sm:$0x3]
        %v328 = vld [vmem:[%s256 + $0xc] sm:$0xf]
        %v329 = vld [vmem:[%s256 + $0x10] sm:$0xf]
        %v330 = vld [vmem:[%s256 + $0x14] sm:$0x3]
        %v331 = vld [vmem:[%s256 + $0x18] sm:$0xf]
        %v332 = vld [vmem:[%s256 + $0x1c] sm:$0xf]
        %v333 = vld [vmem:[%s256 + $0x20] sm:$0x3]
        %v334 = vld [vmem:[%s256 + $0x24] sm:$0xf]
        %v335 = vld [vmem:[%s256 + $0x28] sm:$0xf]
        %v336 = vld [vmem:[%s256 + $0x2c] sm:$0x3]
        %v337 = vld [vmem:[%s256 + $0x30] sm:$0xf]
        %v338 = vld [vmem:[%s256 + $0x34] sm:$0xf]
        %v339 = vld [vmem:[%s256 + $0x38] sm:$0x3]
        %v340 = vld [vmem:[%s256 + $0x3c] sm:$0xf]
        %v341 = vld [vmem:[%s256 + $0x40] sm:$0xf]
        %v342 = vld [vmem:[%s256 + $0x44] sm:$0x3]
        %v343 = vld [vmem:[%s256 + $0x48] sm:$0xf]
        %v344 = vld [vmem:[%s256 + $0x4c] sm:$0xf]
        %v345 = vld [vmem:[%s256 + $0x50] sm:$0x3]
        %v346 = vld [vmem:[%s256 + $0x54] sm:$0xf]
        %v347 = vld [vmem:[%s256 + $0x58] sm:$0xf]
        %v348 = vld [vmem:[%s256 + $0x5c] sm:$0x3]
        %v350 = vpack.i.b16 %v323, %v323
        %v352 = vperm.slane %v350, 0
        %v353 = vunpack.c.l.bf16 %v325
        %v354 = vunpack.c.l.bf16 %v326
        %v355 = vunpack.c.l.bf16 %v327
        %v356 = vunpack.c.l.bf16 %v328
        %v357 = vunpack.c.l.bf16 %v329
        %v358 = vunpack.c.l.bf16 %v330
        %v359 = vunpack.c.l.bf16 %v331
        %v360 = vunpack.c.l.bf16 %v332
        %v361 = vunpack.c.l.bf16 %v333
        %v362 = vunpack.c.l.bf16 %v334
        %v363 = vunpack.c.l.bf16 %v335
        %v364 = vunpack.c.l.bf16 %v336
        %v365 = vunpack.c.l.bf16 %v337
        %v366 = vunpack.c.l.bf16 %v338
        %v367 = vunpack.c.l.bf16 %v339
        %v368 = vunpack.c.l.bf16 %v340
        %v369 = vunpack.c.l.bf16 %v341
        %v370 = vunpack.c.l.bf16 %v342
        %v371 = vunpack.c.l.bf16 %v343
        %v372 = vunpack.c.l.bf16 %v344
        %v373 = vunpack.c.l.bf16 %v345
        %v374 = vunpack.c.l.bf16 %v346
        %v375 = vunpack.c.l.bf16 %v347
        %v376 = vunpack.c.l.bf16 %v348
        %v377 = vunpack.c.l.bf16 %v352
        %v378 = vmul.f32 %v353, %v377
        %v379 = vmul.f32 %v354, %v377
        %v380 = vmul.f32 %v355, %v377
        %v381 = vmul.f32 %v356, %v377
        %v382 = vmul.f32 %v357, %v377
        %v383 = vmul.f32 %v358, %v377
        %v384 = vmul.f32 %v359, %v377
        %v385 = vmul.f32 %v360, %v377
        %v386 = vmul.f32 %v361, %v377
        %v387 = vmul.f32 %v362, %v377
        %v388 = vmul.f32 %v363, %v377
        %v389 = vmul.f32 %v364, %v377
        %v390 = vmul.f32 %v365, %v377
        %v391 = vmul.f32 %v366, %v377
        %v392 = vmul.f32 %v367, %v377
        %v393 = vmul.f32 %v368, %v377
        %v394 = vmul.f32 %v369, %v377
        %v395 = vmul.f32 %v370, %v377
        %v396 = vmul.f32 %v371, %v377
        %v397 = vmul.f32 %v372, %v377
        %v398 = vmul.f32 %v373, %v377
        %v399 = vmul.f32 %v374, %v377
        %v400 = vmul.f32 %v375, %v377
        %v401 = vmul.f32 %v376, %v377
        %v402 = vpack.c.bf16 %v378, %v378
        %v403 = vpack.c.bf16 %v379, %v379
        %v404 = vpack.c.bf16 %v380, %v380
        %v405 = vpack.c.bf16 %v381, %v381
        %v406 = vpack.c.bf16 %v382, %v382
        %v407 = vpack.c.bf16 %v383, %v383
        %v408 = vpack.c.bf16 %v384, %v384
        %v409 = vpack.c.bf16 %v385, %v385
        %v410 = vpack.c.bf16 %v386, %v386
        %v411 = vpack.c.bf16 %v387, %v387
        %v412 = vpack.c.bf16 %v388, %v388
        %v413 = vpack.c.bf16 %v389, %v389
        %v414 = vpack.c.bf16 %v390, %v390
        %v415 = vpack.c.bf16 %v391, %v391
        %v416 = vpack.c.bf16 %v392, %v392
        %v417 = vpack.c.bf16 %v393, %v393
        %v418 = vpack.c.bf16 %v394, %v394
        %v419 = vpack.c.bf16 %v395, %v395
        %v420 = vpack.c.bf16 %v396, %v396
        %v421 = vpack.c.bf16 %v397, %v397
        %v422 = vpack.c.bf16 %v398, %v398
        %v423 = vpack.c.bf16 %v399, %v399
        %v424 = vpack.c.bf16 %v400, %v400
        %v425 = vpack.c.bf16 %v401, %v401
        %v426 = vunpack.c.l.bf16 %v402
        %v427 = vunpack.c.l.bf16 %v403
        %v428 = vunpack.c.l.bf16 %v404
        %v429 = vunpack.c.l.bf16 %v405
        %v430 = vunpack.c.l.bf16 %v406
        %v431 = vunpack.c.l.bf16 %v407
        %v432 = vunpack.c.l.bf16 %v408
        %v433 = vunpack.c.l.bf16 %v409
        %v434 = vunpack.c.l.bf16 %v410
        %v435 = vunpack.c.l.bf16 %v411
        %v436 = vunpack.c.l.bf16 %v412
        %v437 = vunpack.c.l.bf16 %v413
        %v438 = vunpack.c.l.bf16 %v414
        %v439 = vunpack.c.l.bf16 %v415
        %v440 = vunpack.c.l.bf16 %v416
        %v441 = vunpack.c.l.bf16 %v417
        %v442 = vunpack.c.l.bf16 %v418
        %v443 = vunpack.c.l.bf16 %v419
        %v444 = vunpack.c.l.bf16 %v420
        %v445 = vunpack.c.l.bf16 %v421
        %v446 = vunpack.c.l.bf16 %v422
        %v447 = vunpack.c.l.bf16 %v423
        %v448 = vunpack.c.l.bf16 %v424
        %v449 = vunpack.c.l.bf16 %v425
        %v450 = vld [vmem:[%s256] sm:$0xe]
        %v451 = vld [vmem:[%s256 + $0x8] sm:$0x7]
        %v452 = vld [vmem:[%s256 + $0xc] sm:$0xe]
        %v453 = vld [vmem:[%s256 + $0x14] sm:$0x7]
        %v454 = vld [vmem:[%s256 + $0x18] sm:$0xe]
        %v455 = vld [vmem:[%s256 + $0x20] sm:$0x7]
        %v456 = vld [vmem:[%s256 + $0x24] sm:$0xe]
        %v457 = vld [vmem:[%s256 + $0x2c] sm:$0x7]
        %v458 = vld [vmem:[%s256 + $0x30] sm:$0xe]
        %v459 = vld [vmem:[%s256 + $0x38] sm:$0x7]
        %v460 = vld [vmem:[%s256 + $0x3c] sm:$0xe]
        %v461 = vld [vmem:[%s256 + $0x44] sm:$0x7]
        %v462 = vld [vmem:[%s256 + $0x48] sm:$0xe]
        %v463 = vld [vmem:[%s256 + $0x50] sm:$0x7]
        %v464 = vld [vmem:[%s256 + $0x54] sm:$0xe]
        %v465 = vld [vmem:[%s256 + $0x5c] sm:$0x7]
        %v466 = vshrl.u32 %v323, 16
        %v467 = vpack.i.b16 %v466, %v466
        %v469 = vperm.slane %v467, 0
        %v470 = vunpack.c.l.bf16 %v450
        %v471 = vunpack.c.l.bf16 %v451
        %v472 = vunpack.c.l.bf16 %v452
        %v473 = vunpack.c.l.bf16 %v453
        %v474 = vunpack.c.l.bf16 %v454
        %v475 = vunpack.c.l.bf16 %v455
        %v476 = vunpack.c.l.bf16 %v456
        %v477 = vunpack.c.l.bf16 %v457
        %v478 = vunpack.c.l.bf16 %v458
        %v479 = vunpack.c.l.bf16 %v459
        %v480 = vunpack.c.l.bf16 %v460
        %v481 = vunpack.c.l.bf16 %v461
        %v482 = vunpack.c.l.bf16 %v462
        %v483 = vunpack.c.l.bf16 %v463
        %v484 = vunpack.c.l.bf16 %v464
        %v485 = vunpack.c.l.bf16 %v465
        %v486 = vunpack.c.l.bf16 %v469
        %v487 = vmul.f32 %v470, %v486
        %v488 = vmul.f32 %v354, %v486
        %v489 = vmul.f32 %v471, %v486
        %v490 = vmul.f32 %v472, %v486
        %v491 = vmul.f32 %v357, %v486
        %v492 = vmul.f32 %v473, %v486
        %v493 = vmul.f32 %v474, %v486
        %v494 = vmul.f32 %v360, %v486
        %v495 = vmul.f32 %v475, %v486
        %v496 = vmul.f32 %v476, %v486
        %v497 = vmul.f32 %v363, %v486
        %v498 = vmul.f32 %v477, %v486
        %v499 = vmul.f32 %v478, %v486
        %v500 = vmul.f32 %v366, %v486
        %v501 = vmul.f32 %v479, %v486
        %v502 = vmul.f32 %v480, %v486
        %v503 = vmul.f32 %v369, %v486
        %v504 = vmul.f32 %v481, %v486
        %v505 = vmul.f32 %v482, %v486
        %v506 = vmul.f32 %v372, %v486
        %v507 = vmul.f32 %v483, %v486
        %v508 = vmul.f32 %v484, %v486
        %v509 = vmul.f32 %v375, %v486
        %v510 = vmul.f32 %v485, %v486
        %v511 = vpack.c.bf16 %v487, %v487
        %v512 = vpack.c.bf16 %v488, %v488
        %v513 = vpack.c.bf16 %v489, %v489
        %v514 = vpack.c.bf16 %v490, %v490
        %v515 = vpack.c.bf16 %v491, %v491
        %v516 = vpack.c.bf16 %v492, %v492
        %v517 = vpack.c.bf16 %v493, %v493
        %v518 = vpack.c.bf16 %v494, %v494
        %v519 = vpack.c.bf16 %v495, %v495
        %v520 = vpack.c.bf16 %v496, %v496
        %v521 = vpack.c.bf16 %v497, %v497
        %v522 = vpack.c.bf16 %v498, %v498
        %v523 = vpack.c.bf16 %v499, %v499
        %v524 = vpack.c.bf16 %v500, %v500
        %v525 = vpack.c.bf16 %v501, %v501
        %v526 = vpack.c.bf16 %v502, %v502
        %v527 = vpack.c.bf16 %v503, %v503
        %v528 = vpack.c.bf16 %v504, %v504
        %v529 = vpack.c.bf16 %v505, %v505
        %v530 = vpack.c.bf16 %v506, %v506
        %v531 = vpack.c.bf16 %v507, %v507
        %v532 = vpack.c.bf16 %v508, %v508
        %v533 = vpack.c.bf16 %v509, %v509
        %v534 = vpack.c.bf16 %v510, %v510
        %v535 = vunpack.c.l.bf16 %v511
        %v536 = vunpack.c.l.bf16 %v512
        %v537 = vunpack.c.l.bf16 %v513
        %v538 = vunpack.c.l.bf16 %v514
        %v539 = vunpack.c.l.bf16 %v515
        %v540 = vunpack.c.l.bf16 %v516
        %v541 = vunpack.c.l.bf16 %v517
        %v542 = vunpack.c.l.bf16 %v518
        %v543 = vunpack.c.l.bf16 %v519
        %v544 = vunpack.c.l.bf16 %v520
        %v545 = vunpack.c.l.bf16 %v521
        %v546 = vunpack.c.l.bf16 %v522
        %v547 = vunpack.c.l.bf16 %v523
        %v548 = vunpack.c.l.bf16 %v524
        %v549 = vunpack.c.l.bf16 %v525
        %v550 = vunpack.c.l.bf16 %v526
        %v551 = vunpack.c.l.bf16 %v527
        %v552 = vunpack.c.l.bf16 %v528
        %v553 = vunpack.c.l.bf16 %v529
        %v554 = vunpack.c.l.bf16 %v530
        %v555 = vunpack.c.l.bf16 %v531
        %v556 = vunpack.c.l.bf16 %v532
        %v557 = vunpack.c.l.bf16 %v533
        %v558 = vunpack.c.l.bf16 %v534
        %vm583 = vcmask 1045504
        %v584 = vrot.slane %v535, 2
        %v585 = vrot.slane %v536, 2
        %v586 = vsel %vm583, %v584, %v585
        %v587 = vrot.slane %v537, 2
        %v588 = vsel %vm583, %v585, %v587
        %v589 = vrot.slane %v538, 2
        %v590 = vrot.slane %v539, 2
        %v591 = vsel %vm583, %v589, %v590
        %v592 = vrot.slane %v540, 2
        %v593 = vsel %vm583, %v590, %v592
        %v594 = vrot.slane %v541, 2
        %v595 = vrot.slane %v542, 2
        %v596 = vsel %vm583, %v594, %v595
        %v597 = vrot.slane %v543, 2
        %v598 = vsel %vm583, %v595, %v597
        %v599 = vrot.slane %v544, 2
        %v600 = vrot.slane %v545, 2
        %v601 = vsel %vm583, %v599, %v600
        %v602 = vrot.slane %v546, 2
        %v603 = vsel %vm583, %v600, %v602
        %v604 = vrot.slane %v547, 2
        %v605 = vrot.slane %v548, 2
        %v606 = vsel %vm583, %v604, %v605
        %v607 = vrot.slane %v549, 2
        %v608 = vsel %vm583, %v605, %v607
        %v609 = vrot.slane %v550, 2
        %v610 = vrot.slane %v551, 2
        %v611 = vsel %vm583, %v609, %v610
        %v612 = vrot.slane %v552, 2
        %v613 = vsel %vm583, %v610, %v612
        %v614 = vrot.slane %v553, 2
        %v615 = vrot.slane %v554, 2
        %v616 = vsel %vm583, %v614, %v615
        %v617 = vrot.slane %v555, 2
        %v618 = vsel %vm583, %v615, %v617
        %v619 = vrot.slane %v556, 2
        %v620 = vrot.slane %v557, 2
        %v621 = vsel %vm583, %v619, %v620
        %v622 = vrot.slane %v558, 2
        %v623 = vsel %vm583, %v620, %v622
        %v648 = vadd.f32 %v426, %v586
        %v649 = vadd.f32 %v427, %v588
        %v650 = vadd.f32 %v428, %v587
        %v651 = vadd.f32 %v429, %v591
        %v652 = vadd.f32 %v430, %v593
        %v653 = vadd.f32 %v431, %v592
        %v654 = vadd.f32 %v432, %v596
        %v655 = vadd.f32 %v433, %v598
        %v656 = vadd.f32 %v434, %v597
        %v657 = vadd.f32 %v435, %v601
        %v658 = vadd.f32 %v436, %v603
        %v659 = vadd.f32 %v437, %v602
        %v660 = vadd.f32 %v438, %v606
        %v661 = vadd.f32 %v439, %v608
        %v662 = vadd.f32 %v440, %v607
        %v663 = vadd.f32 %v441, %v611
        %v664 = vadd.f32 %v442, %v613
        %v665 = vadd.f32 %v443, %v612
        %v666 = vadd.f32 %v444, %v616
        %v667 = vadd.f32 %v445, %v618
        %v668 = vadd.f32 %v446, %v617
        %v669 = vadd.f32 %v447, %v621
        %v670 = vadd.f32 %v448, %v623
        %v671 = vadd.f32 %v449, %v622
        %v672 = vld [vmem:[%s256] sm:$0xc]
        %v673 = vld [vmem:[%s256 + $0x8] sm:$0xf]
        %v674 = vld [vmem:[%s256 + $0xc] sm:$0xc]
        %v675 = vld [vmem:[%s256 + $0x14] sm:$0xf]
        %v676 = vld [vmem:[%s256 + $0x18] sm:$0xc]
        %v677 = vld [vmem:[%s256 + $0x20] sm:$0xf]
        %v678 = vld [vmem:[%s256 + $0x24] sm:$0xc]
        %v679 = vld [vmem:[%s256 + $0x2c] sm:$0xf]
        %v680 = vld [vmem:[%s256 + $0x30] sm:$0xc]
        %v681 = vld [vmem:[%s256 + $0x38] sm:$0xf]
        %v682 = vld [vmem:[%s256 + $0x3c] sm:$0xc]
        %v683 = vld [vmem:[%s256 + $0x44] sm:$0xf]
        %v684 = vld [vmem:[%s256 + $0x48] sm:$0xc]
        %v685 = vld [vmem:[%s256 + $0x50] sm:$0xf]
        %v686 = vld [vmem:[%s256 + $0x54] sm:$0xc]
        %v687 = vld [vmem:[%s256 + $0x5c] sm:$0xf]
        %v688 = vperm.slane %v350, 1
        %v689 = vunpack.c.l.bf16 %v672
        %v690 = vunpack.c.l.bf16 %v673
        %v691 = vunpack.c.l.bf16 %v674
        %v692 = vunpack.c.l.bf16 %v675
        %v693 = vunpack.c.l.bf16 %v676
        %v694 = vunpack.c.l.bf16 %v677
        %v695 = vunpack.c.l.bf16 %v678
        %v696 = vunpack.c.l.bf16 %v679
        %v697 = vunpack.c.l.bf16 %v680
        %v698 = vunpack.c.l.bf16 %v681
        %v699 = vunpack.c.l.bf16 %v682
        %v700 = vunpack.c.l.bf16 %v683
        %v701 = vunpack.c.l.bf16 %v684
        %v702 = vunpack.c.l.bf16 %v685
        %v703 = vunpack.c.l.bf16 %v686
        %v704 = vunpack.c.l.bf16 %v687
        %v705 = vunpack.c.l.bf16 %v688
        %v706 = vmul.f32 %v689, %v705
        %v707 = vmul.f32 %v354, %v705
        %v708 = vmul.f32 %v690, %v705
        %v709 = vmul.f32 %v691, %v705
        %v710 = vmul.f32 %v357, %v705
        %v711 = vmul.f32 %v692, %v705
        %v712 = vmul.f32 %v693, %v705
        %v713 = vmul.f32 %v360, %v705
        %v714 = vmul.f32 %v694, %v705
        %v715 = vmul.f32 %v695, %v705
        %v716 = vmul.f32 %v363, %v705
        %v717 = vmul.f32 %v696, %v705
        %v718 = vmul.f32 %v697, %v705
        %v719 = vmul.f32 %v366, %v705
        %v720 = vmul.f32 %v698, %v705
        %v721 = vmul.f32 %v699, %v705
        %v722 = vmul.f32 %v369, %v705
        %v723 = vmul.f32 %v700, %v705
        %v724 = vmul.f32 %v701, %v705
        %v725 = vmul.f32 %v372, %v705
        %v726 = vmul.f32 %v702, %v705
        %v727 = vmul.f32 %v703, %v705
        %v728 = vmul.f32 %v375, %v705
        %v729 = vmul.f32 %v704, %v705
        %v730 = vpack.c.bf16 %v706, %v706
        %v731 = vpack.c.bf16 %v707, %v707
        %v732 = vpack.c.bf16 %v708, %v708
        %v733 = vpack.c.bf16 %v709, %v709
        %v734 = vpack.c.bf16 %v710, %v710
        %v735 = vpack.c.bf16 %v711, %v711
        %v736 = vpack.c.bf16 %v712, %v712
        %v737 = vpack.c.bf16 %v713, %v713
        %v738 = vpack.c.bf16 %v714, %v714
        %v739 = vpack.c.bf16 %v715, %v715
        %v740 = vpack.c.bf16 %v716, %v716
        %v741 = vpack.c.bf16 %v717, %v717
        %v742 = vpack.c.bf16 %v718, %v718
        %v743 = vpack.c.bf16 %v719, %v719
        %v744 = vpack.c.bf16 %v720, %v720
        %v745 = vpack.c.bf16 %v721, %v721
        %v746 = vpack.c.bf16 %v722, %v722
        %v747 = vpack.c.bf16 %v723, %v723
        %v748 = vpack.c.bf16 %v724, %v724
        %v749 = vpack.c.bf16 %v725, %v725
        %v750 = vpack.c.bf16 %v726, %v726
        %v751 = vpack.c.bf16 %v727, %v727
        %v752 = vpack.c.bf16 %v728, %v728
        %v753 = vpack.c.bf16 %v729, %v729
        %v754 = vunpack.c.l.bf16 %v730
        %v755 = vunpack.c.l.bf16 %v731
        %v756 = vunpack.c.l.bf16 %v732
        %v757 = vunpack.c.l.bf16 %v733
        %v758 = vunpack.c.l.bf16 %v734
        %v759 = vunpack.c.l.bf16 %v735
        %v760 = vunpack.c.l.bf16 %v736
        %v761 = vunpack.c.l.bf16 %v737
        %v762 = vunpack.c.l.bf16 %v738
        %v763 = vunpack.c.l.bf16 %v739
        %v764 = vunpack.c.l.bf16 %v740
        %v765 = vunpack.c.l.bf16 %v741
        %v766 = vunpack.c.l.bf16 %v742
        %v767 = vunpack.c.l.bf16 %v743
        %v768 = vunpack.c.l.bf16 %v744
        %v769 = vunpack.c.l.bf16 %v745
        %v770 = vunpack.c.l.bf16 %v746
        %v771 = vunpack.c.l.bf16 %v747
        %v772 = vunpack.c.l.bf16 %v748
        %v773 = vunpack.c.l.bf16 %v749
        %v774 = vunpack.c.l.bf16 %v750
        %v775 = vunpack.c.l.bf16 %v751
        %v776 = vunpack.c.l.bf16 %v752
        %v777 = vunpack.c.l.bf16 %v753
        %vm802 = vcmask 1043456
        %v803 = vrot.slane %v754, 4
        %v804 = vrot.slane %v755, 4
        %v805 = vsel %vm802, %v803, %v804
        %v806 = vrot.slane %v756, 4
        %v807 = vsel %vm802, %v804, %v806
        %v808 = vrot.slane %v757, 4
        %v809 = vrot.slane %v758, 4
        %v810 = vsel %vm802, %v808, %v809
        %v811 = vrot.slane %v759, 4
        %v812 = vsel %vm802, %v809, %v811
        %v813 = vrot.slane %v760, 4
        %v814 = vrot.slane %v761, 4
        %v815 = vsel %vm802, %v813, %v814
        %v816 = vrot.slane %v762, 4
        %v817 = vsel %vm802, %v814, %v816
        %v818 = vrot.slane %v763, 4
        %v819 = vrot.slane %v764, 4
        %v820 = vsel %vm802, %v818, %v819
        %v821 = vrot.slane %v765, 4
        %v822 = vsel %vm802, %v819, %v821
        %v823 = vrot.slane %v766, 4
        %v824 = vrot.slane %v767, 4
        %v825 = vsel %vm802, %v823, %v824
        %v826 = vrot.slane %v768, 4
        %v827 = vsel %vm802, %v824, %v826
        %v828 = vrot.slane %v769, 4
        %v829 = vrot.slane %v770, 4
        %v830 = vsel %vm802, %v828, %v829
        %v831 = vrot.slane %v771, 4
        %v832 = vsel %vm802, %v829, %v831
        %v833 = vrot.slane %v772, 4
        %v834 = vrot.slane %v773, 4
        %v835 = vsel %vm802, %v833, %v834
        %v836 = vrot.slane %v774, 4
        %v837 = vsel %vm802, %v834, %v836
        %v838 = vrot.slane %v775, 4
        %v839 = vrot.slane %v776, 4
        %v840 = vsel %vm802, %v838, %v839
        %v841 = vrot.slane %v777, 4
        %v842 = vsel %vm802, %v839, %v841
        %v867 = vadd.f32 %v648, %v805
        %v868 = vadd.f32 %v649, %v807
        %v869 = vadd.f32 %v650, %v806
        %v870 = vadd.f32 %v651, %v810
        %v871 = vadd.f32 %v652, %v812
        %v872 = vadd.f32 %v653, %v811
        %v873 = vadd.f32 %v654, %v815
        %v874 = vadd.f32 %v655, %v817
        %v875 = vadd.f32 %v656, %v816
        %v876 = vadd.f32 %v657, %v820
        %v877 = vadd.f32 %v658, %v822
        %v878 = vadd.f32 %v659, %v821
        %v879 = vadd.f32 %v660, %v825
        %v880 = vadd.f32 %v661, %v827
        %v881 = vadd.f32 %v662, %v826
        %v882 = vadd.f32 %v663, %v830
        %v883 = vadd.f32 %v664, %v832
        %v884 = vadd.f32 %v665, %v831
        %v885 = vadd.f32 %v666, %v835
        %v886 = vadd.f32 %v667, %v837
        %v887 = vadd.f32 %v668, %v836
        %v888 = vadd.f32 %v669, %v840
        %v889 = vadd.f32 %v670, %v842
        %v890 = vadd.f32 %v671, %v841
        %s891 = scalar_lea.vmem %s256, 24 [#allocation2]
        %v892 = vld [vmem:[%s891] sm:$0xf]
        %v893 = vld [vmem:[%s891 + $0x4] sm:$0xf]
        %v894 = vld [vmem:[%s891 + $0x8] sm:$0x3]
        %v895 = vld [vmem:[%s891 + $0xc] sm:$0xf]
        %v896 = vld [vmem:[%s891 + $0x10] sm:$0xf]
        %v897 = vld [vmem:[%s891 + $0x14] sm:$0x3]
        %v898 = vld [vmem:[%s891 + $0x18] sm:$0xf]
        %v899 = vld [vmem:[%s891 + $0x1c] sm:$0xf]
        %v900 = vld [vmem:[%s891 + $0x20] sm:$0x3]
        %v901 = vld [vmem:[%s891 + $0x24] sm:$0xf]
        %v902 = vld [vmem:[%s891 + $0x28] sm:$0xf]
        %v903 = vld [vmem:[%s891 + $0x2c] sm:$0x3]
        %v904 = vld [vmem:[%s891 + $0x30] sm:$0xf]
        %v905 = vld [vmem:[%s891 + $0x34] sm:$0xf]
        %v906 = vld [vmem:[%s891 + $0x38] sm:$0x3]
        %v907 = vld [vmem:[%s891 + $0x3c] sm:$0xf]
        %v908 = vld [vmem:[%s891 + $0x40] sm:$0xf]
        %v909 = vld [vmem:[%s891 + $0x44] sm:$0x3]
        %v910 = vld [vmem:[%s891 + $0x48] sm:$0xf]
        %v911 = vld [vmem:[%s891 + $0x4c] sm:$0xf]
        %v912 = vld [vmem:[%s891 + $0x50] sm:$0x3]
        %v913 = vld [vmem:[%s891 + $0x54] sm:$0xf]
        %v914 = vld [vmem:[%s891 + $0x58] sm:$0xf]
        %v915 = vld [vmem:[%s891 + $0x5c] sm:$0x3]
        %v916 = vperm.slane %v467, 1
        %v917 = vunpack.c.l.bf16 %v892
        %v918 = vunpack.c.l.bf16 %v893
        %v919 = vunpack.c.l.bf16 %v894
        %v920 = vunpack.c.l.bf16 %v895
        %v921 = vunpack.c.l.bf16 %v896
        %v922 = vunpack.c.l.bf16 %v897
        %v923 = vunpack.c.l.bf16 %v898
        %v924 = vunpack.c.l.bf16 %v899
        %v925 = vunpack.c.l.bf16 %v900
        %v926 = vunpack.c.l.bf16 %v901
        %v927 = vunpack.c.l.bf16 %v902
        %v928 = vunpack.c.l.bf16 %v903
        %v929 = vunpack.c.l.bf16 %v904
        %v930 = vunpack.c.l.bf16 %v905
        %v931 = vunpack.c.l.bf16 %v906
        %v932 = vunpack.c.l.bf16 %v907
        %v933 = vunpack.c.l.bf16 %v908
        %v934 = vunpack.c.l.bf16 %v909
        %v935 = vunpack.c.l.bf16 %v910
        %v936 = vunpack.c.l.bf16 %v911
        %v937 = vunpack.c.l.bf16 %v912
        %v938 = vunpack.c.l.bf16 %v913
        %v939 = vunpack.c.l.bf16 %v914
        %v940 = vunpack.c.l.bf16 %v915
        %v941 = vunpack.c.l.bf16 %v916
        %v942 = vmul.f32 %v917, %v941
        %v943 = vmul.f32 %v918, %v941
        %v944 = vmul.f32 %v919, %v941
        %v945 = vmul.f32 %v920, %v941
        %v946 = vmul.f32 %v921, %v941
        %v947 = vmul.f32 %v922, %v941
        %v948 = vmul.f32 %v923, %v941
        %v949 = vmul.f32 %v924, %v941
        %v950 = vmul.f32 %v925, %v941
        %v951 = vmul.f32 %v926, %v941
        %v952 = vmul.f32 %v927, %v941
        %v953 = vmul.f32 %v928, %v941
        %v954 = vmul.f32 %v929, %v941
        %v955 = vmul.f32 %v930, %v941
        %v956 = vmul.f32 %v931, %v941
        %v957 = vmul.f32 %v932, %v941
        %v958 = vmul.f32 %v933, %v941
        %v959 = vmul.f32 %v934, %v941
        %v960 = vmul.f32 %v935, %v941
        %v961 = vmul.f32 %v936, %v941
        %v962 = vmul.f32 %v937, %v941
        %v963 = vmul.f32 %v938, %v941
        %v964 = vmul.f32 %v939, %v941
        %v965 = vmul.f32 %v940, %v941
        %v966 = vpack.c.bf16 %v942, %v942
        %v967 = vpack.c.bf16 %v943, %v943
        %v968 = vpack.c.bf16 %v944, %v944
        %v969 = vpack.c.bf16 %v945, %v945
        %v970 = vpack.c.bf16 %v946, %v946
        %v971 = vpack.c.bf16 %v947, %v947
        %v972 = vpack.c.bf16 %v948, %v948
        %v973 = vpack.c.bf16 %v949, %v949
        %v974 = vpack.c.bf16 %v950, %v950
        %v975 = vpack.c.bf16 %v951, %v951
        %v976 = vpack.c.bf16 %v952, %v952
        %v977 = vpack.c.bf16 %v953, %v953
        %v978 = vpack.c.bf16 %v954, %v954
        %v979 = vpack.c.bf16 %v955, %v955
        %v980 = vpack.c.bf16 %v956, %v956
        %v981 = vpack.c.bf16 %v957, %v957
        %v982 = vpack.c.bf16 %v958, %v958
        %v983 = vpack.c.bf16 %v959, %v959
        %v984 = vpack.c.bf16 %v960, %v960
        %v985 = vpack.c.bf16 %v961, %v961
        %v986 = vpack.c.bf16 %v962, %v962
        %v987 = vpack.c.bf16 %v963, %v963
        %v988 = vpack.c.bf16 %v964, %v964
        %v989 = vpack.c.bf16 %v965, %v965
        %v990 = vunpack.c.l.bf16 %v966
        %v991 = vunpack.c.l.bf16 %v967
        %v992 = vunpack.c.l.bf16 %v968
        %v993 = vunpack.c.l.bf16 %v969
        %v994 = vunpack.c.l.bf16 %v970
        %v995 = vunpack.c.l.bf16 %v971
        %v996 = vunpack.c.l.bf16 %v972
        %v997 = vunpack.c.l.bf16 %v973
        %v998 = vunpack.c.l.bf16 %v974
        %v999 = vunpack.c.l.bf16 %v975
        %v1000 = vunpack.c.l.bf16 %v976
        %v1001 = vunpack.c.l.bf16 %v977
        %v1002 = vunpack.c.l.bf16 %v978
        %v1003 = vunpack.c.l.bf16 %v979
        %v1004 = vunpack.c.l.bf16 %v980
        %v1005 = vunpack.c.l.bf16 %v981
        %v1006 = vunpack.c.l.bf16 %v982
        %v1007 = vunpack.c.l.bf16 %v983
        %v1008 = vunpack.c.l.bf16 %v984
        %v1009 = vunpack.c.l.bf16 %v985
        %v1010 = vunpack.c.l.bf16 %v986
        %v1011 = vunpack.c.l.bf16 %v987
        %v1012 = vunpack.c.l.bf16 %v988
        %v1013 = vunpack.c.l.bf16 %v989
        %v1014 = vadd.f32 %v867, %v990
        %v1015 = vadd.f32 %v868, %v991
        %v1016 = vadd.f32 %v869, %v992
        %v1017 = vadd.f32 %v870, %v993
        %v1018 = vadd.f32 %v871, %v994
        %v1019 = vadd.f32 %v872, %v995
        %v1020 = vadd.f32 %v873, %v996
        %v1021 = vadd.f32 %v874, %v997
        %v1022 = vadd.f32 %v875, %v998
        %v1023 = vadd.f32 %v876, %v999
        %v1024 = vadd.f32 %v877, %v1000
        %v1025 = vadd.f32 %v878, %v1001
        %v1026 = vadd.f32 %v879, %v1002
        %v1027 = vadd.f32 %v880, %v1003
        %v1028 = vadd.f32 %v881, %v1004
        %v1029 = vadd.f32 %v882, %v1005
        %v1030 = vadd.f32 %v883, %v1006
        %v1031 = vadd.f32 %v884, %v1007
        %v1032 = vadd.f32 %v885, %v1008
        %v1033 = vadd.f32 %v886, %v1009
        %v1034 = vadd.f32 %v887, %v1010
        %v1035 = vadd.f32 %v888, %v1011
        %v1036 = vadd.f32 %v889, %v1012
        %v1037 = vadd.f32 %v890, %v1013
        %v1038 = vld [vmem:[%s891] sm:$0xe]
        %v1039 = vld [vmem:[%s891 + $0x8] sm:$0x7]
        %v1040 = vld [vmem:[%s891 + $0xc] sm:$0xe]
        %v1041 = vld [vmem:[%s891 + $0x14] sm:$0x7]
        %v1042 = vld [vmem:[%s891 + $0x18] sm:$0xe]
        %v1043 = vld [vmem:[%s891 + $0x20] sm:$0x7]
        %v1044 = vld [vmem:[%s891 + $0x24] sm:$0xe]
        %v1045 = vld [vmem:[%s891 + $0x2c] sm:$0x7]
        %v1046 = vld [vmem:[%s891 + $0x30] sm:$0xe]
        %v1047 = vld [vmem:[%s891 + $0x38] sm:$0x7]
        %v1048 = vld [vmem:[%s891 + $0x3c] sm:$0xe]
        %v1049 = vld [vmem:[%s891 + $0x44] sm:$0x7]
        %v1050 = vld [vmem:[%s891 + $0x48] sm:$0xe]
        %v1051 = vld [vmem:[%s891 + $0x50] sm:$0x7]
        %v1052 = vld [vmem:[%s891 + $0x54] sm:$0xe]
        %v1053 = vld [vmem:[%s891 + $0x5c] sm:$0x7]
        %v1054 = vperm.slane %v350, 2
        %v1055 = vunpack.c.l.bf16 %v1038
        %v1056 = vunpack.c.l.bf16 %v1039
        %v1057 = vunpack.c.l.bf16 %v1040
        %v1058 = vunpack.c.l.bf16 %v1041
        %v1059 = vunpack.c.l.bf16 %v1042
        %v1060 = vunpack.c.l.bf16 %v1043
        %v1061 = vunpack.c.l.bf16 %v1044
        %v1062 = vunpack.c.l.bf16 %v1045
        %v1063 = vunpack.c.l.bf16 %v1046
        %v1064 = vunpack.c.l.bf16 %v1047
        %v1065 = vunpack.c.l.bf16 %v1048
        %v1066 = vunpack.c.l.bf16 %v1049
        %v1067 = vunpack.c.l.bf16 %v1050
        %v1068 = vunpack.c.l.bf16 %v1051
        %v1069 = vunpack.c.l.bf16 %v1052
        %v1070 = vunpack.c.l.bf16 %v1053
        %v1071 = vunpack.c.l.bf16 %v1054
        %v1072 = vmul.f32 %v1055, %v1071
        %v1073 = vmul.f32 %v918, %v1071
        %v1074 = vmul.f32 %v1056, %v1071
        %v1075 = vmul.f32 %v1057, %v1071
        %v1076 = vmul.f32 %v921, %v1071
        %v1077 = vmul.f32 %v1058, %v1071
        %v1078 = vmul.f32 %v1059, %v1071
        %v1079 = vmul.f32 %v924, %v1071
        %v1080 = vmul.f32 %v1060, %v1071
        %v1081 = vmul.f32 %v1061, %v1071
        %v1082 = vmul.f32 %v927, %v1071
        %v1083 = vmul.f32 %v1062, %v1071
        %v1084 = vmul.f32 %v1063, %v1071
        %v1085 = vmul.f32 %v930, %v1071
        %v1086 = vmul.f32 %v1064, %v1071
        %v1087 = vmul.f32 %v1065, %v1071
        %v1088 = vmul.f32 %v933, %v1071
        %v1089 = vmul.f32 %v1066, %v1071
        %v1090 = vmul.f32 %v1067, %v1071
        %v1091 = vmul.f32 %v936, %v1071
        %v1092 = vmul.f32 %v1068, %v1071
        %v1093 = vmul.f32 %v1069, %v1071
        %v1094 = vmul.f32 %v939, %v1071
        %v1095 = vmul.f32 %v1070, %v1071
        %v1096 = vpack.c.bf16 %v1072, %v1072
        %v1097 = vpack.c.bf16 %v1073, %v1073
        %v1098 = vpack.c.bf16 %v1074, %v1074
        %v1099 = vpack.c.bf16 %v1075, %v1075
        %v1100 = vpack.c.bf16 %v1076, %v1076
        %v1101 = vpack.c.bf16 %v1077, %v1077
        %v1102 = vpack.c.bf16 %v1078, %v1078
        %v1103 = vpack.c.bf16 %v1079, %v1079
        %v1104 = vpack.c.bf16 %v1080, %v1080
        %v1105 = vpack.c.bf16 %v1081, %v1081
        %v1106 = vpack.c.bf16 %v1082, %v1082
        %v1107 = vpack.c.bf16 %v1083, %v1083
        %v1108 = vpack.c.bf16 %v1084, %v1084
        %v1109 = vpack.c.bf16 %v1085, %v1085
        %v1110 = vpack.c.bf16 %v1086, %v1086
        %v1111 = vpack.c.bf16 %v1087, %v1087
        %v1112 = vpack.c.bf16 %v1088, %v1088
        %v1113 = vpack.c.bf16 %v1089, %v1089
        %v1114 = vpack.c.bf16 %v1090, %v1090
        %v1115 = vpack.c.bf16 %v1091, %v1091
        %v1116 = vpack.c.bf16 %v1092, %v1092
        %v1117 = vpack.c.bf16 %v1093, %v1093
        %v1118 = vpack.c.bf16 %v1094, %v1094
        %v1119 = vpack.c.bf16 %v1095, %v1095
        %v1120 = vunpack.c.l.bf16 %v1096
        %v1121 = vunpack.c.l.bf16 %v1097
        %v1122 = vunpack.c.l.bf16 %v1098
        %v1123 = vunpack.c.l.bf16 %v1099
        %v1124 = vunpack.c.l.bf16 %v1100
        %v1125 = vunpack.c.l.bf16 %v1101
        %v1126 = vunpack.c.l.bf16 %v1102
        %v1127 = vunpack.c.l.bf16 %v1103
        %v1128 = vunpack.c.l.bf16 %v1104
        %v1129 = vunpack.c.l.bf16 %v1105
        %v1130 = vunpack.c.l.bf16 %v1106
        %v1131 = vunpack.c.l.bf16 %v1107
        %v1132 = vunpack.c.l.bf16 %v1108
        %v1133 = vunpack.c.l.bf16 %v1109
        %v1134 = vunpack.c.l.bf16 %v1110
        %v1135 = vunpack.c.l.bf16 %v1111
        %v1136 = vunpack.c.l.bf16 %v1112
        %v1137 = vunpack.c.l.bf16 %v1113
        %v1138 = vunpack.c.l.bf16 %v1114
        %v1139 = vunpack.c.l.bf16 %v1115
        %v1140 = vunpack.c.l.bf16 %v1116
        %v1141 = vunpack.c.l.bf16 %v1117
        %v1142 = vunpack.c.l.bf16 %v1118
        %v1143 = vunpack.c.l.bf16 %v1119
        %v1168 = vrot.slane %v1120, 2
        %v1169 = vrot.slane %v1121, 2
        %v1170 = vsel %vm583, %v1168, %v1169
        %v1171 = vrot.slane %v1122, 2
        %v1172 = vsel %vm583, %v1169, %v1171
        %v1173 = vrot.slane %v1123, 2
        %v1174 = vrot.slane %v1124, 2
        %v1175 = vsel %vm583, %v1173, %v1174
        %v1176 = vrot.slane %v1125, 2
        %v1177 = vsel %vm583, %v1174, %v1176
        %v1178 = vrot.slane %v1126, 2
        %v1179 = vrot.slane %v1127, 2
        %v1180 = vsel %vm583, %v1178, %v1179
        %v1181 = vrot.slane %v1128, 2
        %v1182 = vsel %vm583, %v1179, %v1181
        %v1183 = vrot.slane %v1129, 2
        %v1184 = vrot.slane %v1130, 2
        %v1185 = vsel %vm583, %v1183, %v1184
        %v1186 = vrot.slane %v1131, 2
        %v1187 = vsel %vm583, %v1184, %v1186
        %v1188 = vrot.slane %v1132, 2
        %v1189 = vrot.slane %v1133, 2
        %v1190 = vsel %vm583, %v1188, %v1189
        %v1191 = vrot.slane %v1134, 2
        %v1192 = vsel %vm583, %v1189, %v1191
        %v1193 = vrot.slane %v1135, 2
        %v1194 = vrot.slane %v1136, 2
        %v1195 = vsel %vm583, %v1193, %v1194
        %v1196 = vrot.slane %v1137, 2
        %v1197 = vsel %vm583, %v1194, %v1196
        %v1198 = vrot.slane %v1138, 2
        %v1199 = vrot.slane %v1139, 2
        %v1200 = vsel %vm583, %v1198, %v1199
        %v1201 = vrot.slane %v1140, 2
        %v1202 = vsel %vm583, %v1199, %v1201
        %v1203 = vrot.slane %v1141, 2
        %v1204 = vrot.slane %v1142, 2
        %v1205 = vsel %vm583, %v1203, %v1204
        %v1206 = vrot.slane %v1143, 2
        %v1207 = vsel %vm583, %v1204, %v1206
        %v1232 = vadd.f32 %v1014, %v1170
        %v1233 = vadd.f32 %v1015, %v1172
        %v1234 = vadd.f32 %v1016, %v1171
        %v1235 = vadd.f32 %v1017, %v1175
        %v1236 = vadd.f32 %v1018, %v1177
        %v1237 = vadd.f32 %v1019, %v1176
        %v1238 = vadd.f32 %v1020, %v1180
        %v1239 = vadd.f32 %v1021, %v1182
        %v1240 = vadd.f32 %v1022, %v1181
        %v1241 = vadd.f32 %v1023, %v1185
        %v1242 = vadd.f32 %v1024, %v1187
        %v1243 = vadd.f32 %v1025, %v1186
        %v1244 = vadd.f32 %v1026, %v1190
        %v1245 = vadd.f32 %v1027, %v1192
        %v1246 = vadd.f32 %v1028, %v1191
        %v1247 = vadd.f32 %v1029, %v1195
        %v1248 = vadd.f32 %v1030, %v1197
        %v1249 = vadd.f32 %v1031, %v1196
        %v1250 = vadd.f32 %v1032, %v1200
        %v1251 = vadd.f32 %v1033, %v1202
        %v1252 = vadd.f32 %v1034, %v1201
        %v1253 = vadd.f32 %v1035, %v1205
        %v1254 = vadd.f32 %v1036, %v1207
        %v1255 = vadd.f32 %v1037, %v1206
        %v1256 = vld [vmem:[%s891] sm:$0xc]
        %v1257 = vld [vmem:[%s891 + $0x8] sm:$0xf]
        %v1258 = vld [vmem:[%s891 + $0xc] sm:$0xc]
        %v1259 = vld [vmem:[%s891 + $0x14] sm:$0xf]
        %v1260 = vld [vmem:[%s891 + $0x18] sm:$0xc]
        %v1261 = vld [vmem:[%s891 + $0x20] sm:$0xf]
        %v1262 = vld [vmem:[%s891 + $0x24] sm:$0xc]
        %v1263 = vld [vmem:[%s891 + $0x2c] sm:$0xf]
        %v1264 = vld [vmem:[%s891 + $0x30] sm:$0xc]
        %v1265 = vld [vmem:[%s891 + $0x38] sm:$0xf]
        %v1266 = vld [vmem:[%s891 + $0x3c] sm:$0xc]
        %v1267 = vld [vmem:[%s891 + $0x44] sm:$0xf]
        %v1268 = vld [vmem:[%s891 + $0x48] sm:$0xc]
        %v1269 = vld [vmem:[%s891 + $0x50] sm:$0xf]
        %v1270 = vld [vmem:[%s891 + $0x54] sm:$0xc]
        %v1271 = vld [vmem:[%s891 + $0x5c] sm:$0xf]
        %v1272 = vperm.slane %v467, 2
        %v1273 = vunpack.c.l.bf16 %v1256
        %v1274 = vunpack.c.l.bf16 %v1257
        %v1275 = vunpack.c.l.bf16 %v1258
        %v1276 = vunpack.c.l.bf16 %v1259
        %v1277 = vunpack.c.l.bf16 %v1260
        %v1278 = vunpack.c.l.bf16 %v1261
        %v1279 = vunpack.c.l.bf16 %v1262
        %v1280 = vunpack.c.l.bf16 %v1263
        %v1281 = vunpack.c.l.bf16 %v1264
        %v1282 = vunpack.c.l.bf16 %v1265
        %v1283 = vunpack.c.l.bf16 %v1266
        %v1284 = vunpack.c.l.bf16 %v1267
        %v1285 = vunpack.c.l.bf16 %v1268
        %v1286 = vunpack.c.l.bf16 %v1269
        %v1287 = vunpack.c.l.bf16 %v1270
        %v1288 = vunpack.c.l.bf16 %v1271
        %v1289 = vunpack.c.l.bf16 %v1272
        %v1290 = vmul.f32 %v1273, %v1289
        %v1291 = vmul.f32 %v918, %v1289
        %v1292 = vmul.f32 %v1274, %v1289
        %v1293 = vmul.f32 %v1275, %v1289
        %v1294 = vmul.f32 %v921, %v1289
        %v1295 = vmul.f32 %v1276, %v1289
        %v1296 = vmul.f32 %v1277, %v1289
        %v1297 = vmul.f32 %v924, %v1289
        %v1298 = vmul.f32 %v1278, %v1289
        %v1299 = vmul.f32 %v1279, %v1289
        %v1300 = vmul.f32 %v927, %v1289
        %v1301 = vmul.f32 %v1280, %v1289
        %v1302 = vmul.f32 %v1281, %v1289
        %v1303 = vmul.f32 %v930, %v1289
        %v1304 = vmul.f32 %v1282, %v1289
        %v1305 = vmul.f32 %v1283, %v1289
        %v1306 = vmul.f32 %v933, %v1289
        %v1307 = vmul.f32 %v1284, %v1289
        %v1308 = vmul.f32 %v1285, %v1289
        %v1309 = vmul.f32 %v936, %v1289
        %v1310 = vmul.f32 %v1286, %v1289
        %v1311 = vmul.f32 %v1287, %v1289
        %v1312 = vmul.f32 %v939, %v1289
        %v1313 = vmul.f32 %v1288, %v1289
        %v1314 = vpack.c.bf16 %v1290, %v1290
        %v1315 = vpack.c.bf16 %v1291, %v1291
        %v1316 = vpack.c.bf16 %v1292, %v1292
        %v1317 = vpack.c.bf16 %v1293, %v1293
        %v1318 = vpack.c.bf16 %v1294, %v1294
        %v1319 = vpack.c.bf16 %v1295, %v1295
        %v1320 = vpack.c.bf16 %v1296, %v1296
        %v1321 = vpack.c.bf16 %v1297, %v1297
        %v1322 = vpack.c.bf16 %v1298, %v1298
        %v1323 = vpack.c.bf16 %v1299, %v1299
        %v1324 = vpack.c.bf16 %v1300, %v1300
        %v1325 = vpack.c.bf16 %v1301, %v1301
        %v1326 = vpack.c.bf16 %v1302, %v1302
        %v1327 = vpack.c.bf16 %v1303, %v1303
        %v1328 = vpack.c.bf16 %v1304, %v1304
        %v1329 = vpack.c.bf16 %v1305, %v1305
        %v1330 = vpack.c.bf16 %v1306, %v1306
        %v1331 = vpack.c.bf16 %v1307, %v1307
        %v1332 = vpack.c.bf16 %v1308, %v1308
        %v1333 = vpack.c.bf16 %v1309, %v1309
        %v1334 = vpack.c.bf16 %v1310, %v1310
        %v1335 = vpack.c.bf16 %v1311, %v1311
        %v1336 = vpack.c.bf16 %v1312, %v1312
        %v1337 = vpack.c.bf16 %v1313, %v1313
        %v1338 = vunpack.c.l.bf16 %v1314
        %v1339 = vunpack.c.l.bf16 %v1315
        %v1340 = vunpack.c.l.bf16 %v1316
        %v1341 = vunpack.c.l.bf16 %v1317
        %v1342 = vunpack.c.l.bf16 %v1318
        %v1343 = vunpack.c.l.bf16 %v1319
        %v1344 = vunpack.c.l.bf16 %v1320
        %v1345 = vunpack.c.l.bf16 %v1321
        %v1346 = vunpack.c.l.bf16 %v1322
        %v1347 = vunpack.c.l.bf16 %v1323
        %v1348 = vunpack.c.l.bf16 %v1324
        %v1349 = vunpack.c.l.bf16 %v1325
        %v1350 = vunpack.c.l.bf16 %v1326
        %v1351 = vunpack.c.l.bf16 %v1327
        %v1352 = vunpack.c.l.bf16 %v1328
        %v1353 = vunpack.c.l.bf16 %v1329
        %v1354 = vunpack.c.l.bf16 %v1330
        %v1355 = vunpack.c.l.bf16 %v1331
        %v1356 = vunpack.c.l.bf16 %v1332
        %v1357 = vunpack.c.l.bf16 %v1333
        %v1358 = vunpack.c.l.bf16 %v1334
        %v1359 = vunpack.c.l.bf16 %v1335
        %v1360 = vunpack.c.l.bf16 %v1336
        %v1361 = vunpack.c.l.bf16 %v1337
        %v1386 = vrot.slane %v1338, 4
        %v1387 = vrot.slane %v1339, 4
        %v1388 = vsel %vm802, %v1386, %v1387
        %v1389 = vrot.slane %v1340, 4
        %v1390 = vsel %vm802, %v1387, %v1389
        %v1391 = vrot.slane %v1341, 4
        %v1392 = vrot.slane %v1342, 4
        %v1393 = vsel %vm802, %v1391, %v1392
        %v1394 = vrot.slane %v1343, 4
        %v1395 = vsel %vm802, %v1392, %v1394
        %v1396 = vrot.slane %v1344, 4
        %v1397 = vrot.slane %v1345, 4
        %v1398 = vsel %vm802, %v1396, %v1397
        %v1399 = vrot.slane %v1346, 4
        %v1400 = vsel %vm802, %v1397, %v1399
        %v1401 = vrot.slane %v1347, 4
        %v1402 = vrot.slane %v1348, 4
        %v1403 = vsel %vm802, %v1401, %v1402
        %v1404 = vrot.slane %v1349, 4
        %v1405 = vsel %vm802, %v1402, %v1404
        %v1406 = vrot.slane %v1350, 4
        %v1407 = vrot.slane %v1351, 4
        %v1408 = vsel %vm802, %v1406, %v1407
        %v1409 = vrot.slane %v1352, 4
        %v1410 = vsel %vm802, %v1407, %v1409
        %v1411 = vrot.slane %v1353, 4
        %v1412 = vrot.slane %v1354, 4
        %v1413 = vsel %vm802, %v1411, %v1412
        %v1414 = vrot.slane %v1355, 4
        %v1415 = vsel %vm802, %v1412, %v1414
        %v1416 = vrot.slane %v1356, 4
        %v1417 = vrot.slane %v1357, 4
        %v1418 = vsel %vm802, %v1416, %v1417
        %v1419 = vrot.slane %v1358, 4
        %v1420 = vsel %vm802, %v1417, %v1419
        %v1421 = vrot.slane %v1359, 4
        %v1422 = vrot.slane %v1360, 4
        %v1423 = vsel %vm802, %v1421, %v1422
        %v1424 = vrot.slane %v1361, 4
        %v1425 = vsel %vm802, %v1422, %v1424
        %v1450 = vadd.f32 %v1232, %v1388
        %v1451 = vadd.f32 %v1233, %v1390
        %v1452 = vadd.f32 %v1234, %v1389
        %v1453 = vadd.f32 %v1235, %v1393
        %v1454 = vadd.f32 %v1236, %v1395
        %v1455 = vadd.f32 %v1237, %v1394
        %v1456 = vadd.f32 %v1238, %v1398
        %v1457 = vadd.f32 %v1239, %v1400
        %v1458 = vadd.f32 %v1240, %v1399
        %v1459 = vadd.f32 %v1241, %v1403
        %v1460 = vadd.f32 %v1242, %v1405
        %v1461 = vadd.f32 %v1243, %v1404
        %v1462 = vadd.f32 %v1244, %v1408
        %v1463 = vadd.f32 %v1245, %v1410
        %v1464 = vadd.f32 %v1246, %v1409
        %v1465 = vadd.f32 %v1247, %v1413
        %v1466 = vadd.f32 %v1248, %v1415
        %v1467 = vadd.f32 %v1249, %v1414
        %v1468 = vadd.f32 %v1250, %v1418
        %v1469 = vadd.f32 %v1251, %v1420
        %v1470 = vadd.f32 %v1252, %v1419
        %v1471 = vadd.f32 %v1253, %v1423
        %v1472 = vadd.f32 %v1254, %v1425
        %v1473 = vadd.f32 %v1255, %v1424
        %s1474 = scalar_lea.vmem %s256, 48 [#allocation2]
        %v1475 = vld [vmem:[%s1474] sm:$0xf]
        %v1476 = vld [vmem:[%s1474 + $0x4] sm:$0xf]
        %v1477 = vld [vmem:[%s1474 + $0x8] sm:$0x3]
        %v1478 = vld [vmem:[%s1474 + $0xc] sm:$0xf]
        %v1479 = vld [vmem:[%s1474 + $0x10] sm:$0xf]
        %v1480 = vld [vmem:[%s1474 + $0x14] sm:$0x3]
        %v1481 = vld [vmem:[%s1474 + $0x18] sm:$0xf]
        %v1482 = vld [vmem:[%s1474 + $0x1c] sm:$0xf]
        %v1483 = vld [vmem:[%s1474 + $0x20] sm:$0x3]
        %v1484 = vld [vmem:[%s1474 + $0x24] sm:$0xf]
        %v1485 = vld [vmem:[%s1474 + $0x28] sm:$0xf]
        %v1486 = vld [vmem:[%s1474 + $0x2c] sm:$0x3]
        %v1487 = vld [vmem:[%s1474 + $0x30] sm:$0xf]
        %v1488 = vld [vmem:[%s1474 + $0x34] sm:$0xf]
        %v1489 = vld [vmem:[%s1474 + $0x38] sm:$0x3]
        %v1490 = vld [vmem:[%s1474 + $0x3c] sm:$0xf]
        %v1491 = vld [vmem:[%s1474 + $0x40] sm:$0xf]
        %v1492 = vld [vmem:[%s1474 + $0x44] sm:$0x3]
        %v1493 = vld [vmem:[%s1474 + $0x48] sm:$0xf]
        %v1494 = vld [vmem:[%s1474 + $0x4c] sm:$0xf]
        %v1495 = vld [vmem:[%s1474 + $0x50] sm:$0x3]
        %v1496 = vld [vmem:[%s1474 + $0x54] sm:$0xf]
        %v1497 = vld [vmem:[%s1474 + $0x58] sm:$0xf]
        %v1498 = vld [vmem:[%s1474 + $0x5c] sm:$0x3]
        %v1499 = vperm.slane %v350, 3
        %v1500 = vunpack.c.l.bf16 %v1475
        %v1501 = vunpack.c.l.bf16 %v1476
        %v1502 = vunpack.c.l.bf16 %v1477
        %v1503 = vunpack.c.l.bf16 %v1478
        %v1504 = vunpack.c.l.bf16 %v1479
        %v1505 = vunpack.c.l.bf16 %v1480
        %v1506 = vunpack.c.l.bf16 %v1481
        %v1507 = vunpack.c.l.bf16 %v1482
        %v1508 = vunpack.c.l.bf16 %v1483
        %v1509 = vunpack.c.l.bf16 %v1484
        %v1510 = vunpack.c.l.bf16 %v1485
        %v1511 = vunpack.c.l.bf16 %v1486
        %v1512 = vunpack.c.l.bf16 %v1487
        %v1513 = vunpack.c.l.bf16 %v1488
        %v1514 = vunpack.c.l.bf16 %v1489
        %v1515 = vunpack.c.l.bf16 %v1490
        %v1516 = vunpack.c.l.bf16 %v1491
        %v1517 = vunpack.c.l.bf16 %v1492
        %v1518 = vunpack.c.l.bf16 %v1493
        %v1519 = vunpack.c.l.bf16 %v1494
        %v1520 = vunpack.c.l.bf16 %v1495
        %v1521 = vunpack.c.l.bf16 %v1496
        %v1522 = vunpack.c.l.bf16 %v1497
        %v1523 = vunpack.c.l.bf16 %v1498
        %v1524 = vunpack.c.l.bf16 %v1499
        %v1525 = vmul.f32 %v1500, %v1524
        %v1526 = vmul.f32 %v1501, %v1524
        %v1527 = vmul.f32 %v1502, %v1524
        %v1528 = vmul.f32 %v1503, %v1524
        %v1529 = vmul.f32 %v1504, %v1524
        %v1530 = vmul.f32 %v1505, %v1524
        %v1531 = vmul.f32 %v1506, %v1524
        %v1532 = vmul.f32 %v1507, %v1524
        %v1533 = vmul.f32 %v1508, %v1524
        %v1534 = vmul.f32 %v1509, %v1524
        %v1535 = vmul.f32 %v1510, %v1524
        %v1536 = vmul.f32 %v1511, %v1524
        %v1537 = vmul.f32 %v1512, %v1524
        %v1538 = vmul.f32 %v1513, %v1524
        %v1539 = vmul.f32 %v1514, %v1524
        %v1540 = vmul.f32 %v1515, %v1524
        %v1541 = vmul.f32 %v1516, %v1524
        %v1542 = vmul.f32 %v1517, %v1524
        %v1543 = vmul.f32 %v1518, %v1524
        %v1544 = vmul.f32 %v1519, %v1524
        %v1545 = vmul.f32 %v1520, %v1524
        %v1546 = vmul.f32 %v1521, %v1524
        %v1547 = vmul.f32 %v1522, %v1524
        %v1548 = vmul.f32 %v1523, %v1524
        %v1549 = vpack.c.bf16 %v1525, %v1525
        %v1550 = vpack.c.bf16 %v1526, %v1526
        %v1551 = vpack.c.bf16 %v1527, %v1527
        %v1552 = vpack.c.bf16 %v1528, %v1528
        %v1553 = vpack.c.bf16 %v1529, %v1529
        %v1554 = vpack.c.bf16 %v1530, %v1530
        %v1555 = vpack.c.bf16 %v1531, %v1531
        %v1556 = vpack.c.bf16 %v1532, %v1532
        %v1557 = vpack.c.bf16 %v1533, %v1533
        %v1558 = vpack.c.bf16 %v1534, %v1534
        %v1559 = vpack.c.bf16 %v1535, %v1535
        %v1560 = vpack.c.bf16 %v1536, %v1536
        %v1561 = vpack.c.bf16 %v1537, %v1537
        %v1562 = vpack.c.bf16 %v1538, %v1538
        %v1563 = vpack.c.bf16 %v1539, %v1539
        %v1564 = vpack.c.bf16 %v1540, %v1540
        %v1565 = vpack.c.bf16 %v1541, %v1541
        %v1566 = vpack.c.bf16 %v1542, %v1542
        %v1567 = vpack.c.bf16 %v1543, %v1543
        %v1568 = vpack.c.bf16 %v1544, %v1544
        %v1569 = vpack.c.bf16 %v1545, %v1545
        %v1570 = vpack.c.bf16 %v1546, %v1546
        %v1571 = vpack.c.bf16 %v1547, %v1547
        %v1572 = vpack.c.bf16 %v1548, %v1548
        %v1573 = vunpack.c.l.bf16 %v1549
        %v1574 = vunpack.c.l.bf16 %v1550
        %v1575 = vunpack.c.l.bf16 %v1551
        %v1576 = vunpack.c.l.bf16 %v1552
        %v1577 = vunpack.c.l.bf16 %v1553
        %v1578 = vunpack.c.l.bf16 %v1554
        %v1579 = vunpack.c.l.bf16 %v1555
        %v1580 = vunpack.c.l.bf16 %v1556
        %v1581 = vunpack.c.l.bf16 %v1557
        %v1582 = vunpack.c.l.bf16 %v1558
        %v1583 = vunpack.c.l.bf16 %v1559
        %v1584 = vunpack.c.l.bf16 %v1560
        %v1585 = vunpack.c.l.bf16 %v1561
        %v1586 = vunpack.c.l.bf16 %v1562
        %v1587 = vunpack.c.l.bf16 %v1563
        %v1588 = vunpack.c.l.bf16 %v1564
        %v1589 = vunpack.c.l.bf16 %v1565
        %v1590 = vunpack.c.l.bf16 %v1566
        %v1591 = vunpack.c.l.bf16 %v1567
        %v1592 = vunpack.c.l.bf16 %v1568
        %v1593 = vunpack.c.l.bf16 %v1569
        %v1594 = vunpack.c.l.bf16 %v1570
        %v1595 = vunpack.c.l.bf16 %v1571
        %v1596 = vunpack.c.l.bf16 %v1572
        %v1597 = vadd.f32 %v1450, %v1573
        %v1598 = vadd.f32 %v1451, %v1574
        %v1599 = vadd.f32 %v1452, %v1575
        %v1600 = vadd.f32 %v1453, %v1576
        %v1601 = vadd.f32 %v1454, %v1577
        %v1602 = vadd.f32 %v1455, %v1578
        %v1603 = vadd.f32 %v1456, %v1579
        %v1604 = vadd.f32 %v1457, %v1580
        %v1605 = vadd.f32 %v1458, %v1581
        %v1606 = vadd.f32 %v1459, %v1582
        %v1607 = vadd.f32 %v1460, %v1583
        %v1608 = vadd.f32 %v1461, %v1584
        %v1609 = vadd.f32 %v1462, %v1585
        %v1610 = vadd.f32 %v1463, %v1586
        %v1611 = vadd.f32 %v1464, %v1587
        %v1612 = vadd.f32 %v1465, %v1588
        %v1613 = vadd.f32 %v1466, %v1589
        %v1614 = vadd.f32 %v1467, %v1590
        %v1615 = vadd.f32 %v1468, %v1591
        %v1616 = vadd.f32 %v1469, %v1592
        %v1617 = vadd.f32 %v1470, %v1593
        %v1618 = vadd.f32 %v1471, %v1594
        %v1619 = vadd.f32 %v1472, %v1595
        %v1620 = vadd.f32 %v1473, %v1596
        %v1621 = vld [vmem:[%s1474] sm:$0xe]
        %v1622 = vld [vmem:[%s1474 + $0x8] sm:$0x7]
        %v1623 = vld [vmem:[%s1474 + $0xc] sm:$0xe]
        %v1624 = vld [vmem:[%s1474 + $0x14] sm:$0x7]
        %v1625 = vld [vmem:[%s1474 + $0x18] sm:$0xe]
        %v1626 = vld [vmem:[%s1474 + $0x20] sm:$0x7]
        %v1627 = vld [vmem:[%s1474 + $0x24] sm:$0xe]
        %v1628 = vld [vmem:[%s1474 + $0x2c] sm:$0x7]
        %v1629 = vld [vmem:[%s1474 + $0x30] sm:$0xe]
        %v1630 = vld [vmem:[%s1474 + $0x38] sm:$0x7]
        %v1631 = vld [vmem:[%s1474 + $0x3c] sm:$0xe]
        %v1632 = vld [vmem:[%s1474 + $0x44] sm:$0x7]
        %v1633 = vld [vmem:[%s1474 + $0x48] sm:$0xe]
        %v1634 = vld [vmem:[%s1474 + $0x50] sm:$0x7]
        %v1635 = vld [vmem:[%s1474 + $0x54] sm:$0xe]
        %v1636 = vld [vmem:[%s1474 + $0x5c] sm:$0x7]
        %v1637 = vperm.slane %v467, 3
        %v1638 = vunpack.c.l.bf16 %v1621
        %v1639 = vunpack.c.l.bf16 %v1622
        %v1640 = vunpack.c.l.bf16 %v1623
        %v1641 = vunpack.c.l.bf16 %v1624
        %v1642 = vunpack.c.l.bf16 %v1625
        %v1643 = vunpack.c.l.bf16 %v1626
        %v1644 = vunpack.c.l.bf16 %v1627
        %v1645 = vunpack.c.l.bf16 %v1628
        %v1646 = vunpack.c.l.bf16 %v1629
        %v1647 = vunpack.c.l.bf16 %v1630
        %v1648 = vunpack.c.l.bf16 %v1631
        %v1649 = vunpack.c.l.bf16 %v1632
        %v1650 = vunpack.c.l.bf16 %v1633
        %v1651 = vunpack.c.l.bf16 %v1634
        %v1652 = vunpack.c.l.bf16 %v1635
        %v1653 = vunpack.c.l.bf16 %v1636
        %v1654 = vunpack.c.l.bf16 %v1637
        %v1655 = vmul.f32 %v1638, %v1654
        %v1656 = vmul.f32 %v1501, %v1654
        %v1657 = vmul.f32 %v1639, %v1654
        %v1658 = vmul.f32 %v1640, %v1654
        %v1659 = vmul.f32 %v1504, %v1654
        %v1660 = vmul.f32 %v1641, %v1654
        %v1661 = vmul.f32 %v1642, %v1654
        %v1662 = vmul.f32 %v1507, %v1654
        %v1663 = vmul.f32 %v1643, %v1654
        %v1664 = vmul.f32 %v1644, %v1654
        %v1665 = vmul.f32 %v1510, %v1654
        %v1666 = vmul.f32 %v1645, %v1654
        %v1667 = vmul.f32 %v1646, %v1654
        %v1668 = vmul.f32 %v1513, %v1654
        %v1669 = vmul.f32 %v1647, %v1654
        %v1670 = vmul.f32 %v1648, %v1654
        %v1671 = vmul.f32 %v1516, %v1654
        %v1672 = vmul.f32 %v1649, %v1654
        %v1673 = vmul.f32 %v1650, %v1654
        %v1674 = vmul.f32 %v1519, %v1654
        %v1675 = vmul.f32 %v1651, %v1654
        %v1676 = vmul.f32 %v1652, %v1654
        %v1677 = vmul.f32 %v1522, %v1654
        %v1678 = vmul.f32 %v1653, %v1654
        %v1679 = vpack.c.bf16 %v1655, %v1655
        %v1680 = vpack.c.bf16 %v1656, %v1656
        %v1681 = vpack.c.bf16 %v1657, %v1657
        %v1682 = vpack.c.bf16 %v1658, %v1658
        %v1683 = vpack.c.bf16 %v1659, %v1659
        %v1684 = vpack.c.bf16 %v1660, %v1660
        %v1685 = vpack.c.bf16 %v1661, %v1661
        %v1686 = vpack.c.bf16 %v1662, %v1662
        %v1687 = vpack.c.bf16 %v1663, %v1663
        %v1688 = vpack.c.bf16 %v1664, %v1664
        %v1689 = vpack.c.bf16 %v1665, %v1665
        %v1690 = vpack.c.bf16 %v1666, %v1666
        %v1691 = vpack.c.bf16 %v1667, %v1667
        %v1692 = vpack.c.bf16 %v1668, %v1668
        %v1693 = vpack.c.bf16 %v1669, %v1669
        %v1694 = vpack.c.bf16 %v1670, %v1670
        %v1695 = vpack.c.bf16 %v1671, %v1671
        %v1696 = vpack.c.bf16 %v1672, %v1672
        %v1697 = vpack.c.bf16 %v1673, %v1673
        %v1698 = vpack.c.bf16 %v1674, %v1674
        %v1699 = vpack.c.bf16 %v1675, %v1675
        %v1700 = vpack.c.bf16 %v1676, %v1676
        %v1701 = vpack.c.bf16 %v1677, %v1677
        %v1702 = vpack.c.bf16 %v1678, %v1678
        %v1703 = vunpack.c.l.bf16 %v1679
        %v1704 = vunpack.c.l.bf16 %v1680
        %v1705 = vunpack.c.l.bf16 %v1681
        %v1706 = vunpack.c.l.bf16 %v1682
        %v1707 = vunpack.c.l.bf16 %v1683
        %v1708 = vunpack.c.l.bf16 %v1684
        %v1709 = vunpack.c.l.bf16 %v1685
        %v1710 = vunpack.c.l.bf16 %v1686
        %v1711 = vunpack.c.l.bf16 %v1687
        %v1712 = vunpack.c.l.bf16 %v1688
        %v1713 = vunpack.c.l.bf16 %v1689
        %v1714 = vunpack.c.l.bf16 %v1690
        %v1715 = vunpack.c.l.bf16 %v1691
        %v1716 = vunpack.c.l.bf16 %v1692
        %v1717 = vunpack.c.l.bf16 %v1693
        %v1718 = vunpack.c.l.bf16 %v1694
        %v1719 = vunpack.c.l.bf16 %v1695
        %v1720 = vunpack.c.l.bf16 %v1696
        %v1721 = vunpack.c.l.bf16 %v1697
        %v1722 = vunpack.c.l.bf16 %v1698
        %v1723 = vunpack.c.l.bf16 %v1699
        %v1724 = vunpack.c.l.bf16 %v1700
        %v1725 = vunpack.c.l.bf16 %v1701
        %v1726 = vunpack.c.l.bf16 %v1702
        %v1751 = vrot.slane %v1703, 2
        %v1752 = vrot.slane %v1704, 2
        %v1753 = vsel %vm583, %v1751, %v1752
        %v1754 = vrot.slane %v1705, 2
        %v1755 = vsel %vm583, %v1752, %v1754
        %v1756 = vrot.slane %v1706, 2
        %v1757 = vrot.slane %v1707, 2
        %v1758 = vsel %vm583, %v1756, %v1757
        %v1759 = vrot.slane %v1708, 2
        %v1760 = vsel %vm583, %v1757, %v1759
        %v1761 = vrot.slane %v1709, 2
        %v1762 = vrot.slane %v1710, 2
        %v1763 = vsel %vm583, %v1761, %v1762
        %v1764 = vrot.slane %v1711, 2
        %v1765 = vsel %vm583, %v1762, %v1764
        %v1766 = vrot.slane %v1712, 2
        %v1767 = vrot.slane %v1713, 2
        %v1768 = vsel %vm583, %v1766, %v1767
        %v1769 = vrot.slane %v1714, 2
        %v1770 = vsel %vm583, %v1767, %v1769
        %v1771 = vrot.slane %v1715, 2
        %v1772 = vrot.slane %v1716, 2
        %v1773 = vsel %vm583, %v1771, %v1772
        %v1774 = vrot.slane %v1717, 2
        %v1775 = vsel %vm583, %v1772, %v1774
        %v1776 = vrot.slane %v1718, 2
        %v1777 = vrot.slane %v1719, 2
        %v1778 = vsel %vm583, %v1776, %v1777
        %v1779 = vrot.slane %v1720, 2
        %v1780 = vsel %vm583, %v1777, %v1779
        %v1781 = vrot.slane %v1721, 2
        %v1782 = vrot.slane %v1722, 2
        %v1783 = vsel %vm583, %v1781, %v1782
        %v1784 = vrot.slane %v1723, 2
        %v1785 = vsel %vm583, %v1782, %v1784
        %v1786 = vrot.slane %v1724, 2
        %v1787 = vrot.slane %v1725, 2
        %v1788 = vsel %vm583, %v1786, %v1787
        %v1789 = vrot.slane %v1726, 2
        %v1790 = vsel %vm583, %v1787, %v1789
        %v1815 = vadd.f32 %v1597, %v1753
        %v1816 = vadd.f32 %v1598, %v1755
        %v1817 = vadd.f32 %v1599, %v1754
        %v1818 = vadd.f32 %v1600, %v1758
        %v1819 = vadd.f32 %v1601, %v1760
        %v1820 = vadd.f32 %v1602, %v1759
        %v1821 = vadd.f32 %v1603, %v1763
        %v1822 = vadd.f32 %v1604, %v1765
        %v1823 = vadd.f32 %v1605, %v1764
        %v1824 = vadd.f32 %v1606, %v1768
        %v1825 = vadd.f32 %v1607, %v1770
        %v1826 = vadd.f32 %v1608, %v1769
        %v1827 = vadd.f32 %v1609, %v1773
        %v1828 = vadd.f32 %v1610, %v1775
        %v1829 = vadd.f32 %v1611, %v1774
        %v1830 = vadd.f32 %v1612, %v1778
        %v1831 = vadd.f32 %v1613, %v1780
        %v1832 = vadd.f32 %v1614, %v1779
        %v1833 = vadd.f32 %v1615, %v1783
        %v1834 = vadd.f32 %v1616, %v1785
        %v1835 = vadd.f32 %v1617, %v1784
        %v1836 = vadd.f32 %v1618, %v1788
        %v1837 = vadd.f32 %v1619, %v1790
        %v1838 = vadd.f32 %v1620, %v1789
        %v1839 = vld [vmem:[%s1474] sm:$0xc]
        %v1840 = vld [vmem:[%s1474 + $0x8] sm:$0xf]
        %v1841 = vld [vmem:[%s1474 + $0xc] sm:$0xc]
        %v1842 = vld [vmem:[%s1474 + $0x14] sm:$0xf]
        %v1843 = vld [vmem:[%s1474 + $0x18] sm:$0xc]
        %v1844 = vld [vmem:[%s1474 + $0x20] sm:$0xf]
        %v1845 = vld [vmem:[%s1474 + $0x24] sm:$0xc]
        %v1846 = vld [vmem:[%s1474 + $0x2c] sm:$0xf]
        %v1847 = vld [vmem:[%s1474 + $0x30] sm:$0xc]
        %v1848 = vld [vmem:[%s1474 + $0x38] sm:$0xf]
        %v1849 = vld [vmem:[%s1474 + $0x3c] sm:$0xc]
        %v1850 = vld [vmem:[%s1474 + $0x44] sm:$0xf]
        %v1851 = vld [vmem:[%s1474 + $0x48] sm:$0xc]
        %v1852 = vld [vmem:[%s1474 + $0x50] sm:$0xf]
        %v1853 = vld [vmem:[%s1474 + $0x54] sm:$0xc]
        %v1854 = vld [vmem:[%s1474 + $0x5c] sm:$0xf]
        %v1856 = vpack.i.b16 %v324, %v324
        %v1858 = vperm.slane %v1856, 0
        %v1859 = vunpack.c.l.bf16 %v1839
        %v1860 = vunpack.c.l.bf16 %v1840
        %v1861 = vunpack.c.l.bf16 %v1841
        %v1862 = vunpack.c.l.bf16 %v1842
        %v1863 = vunpack.c.l.bf16 %v1843
        %v1864 = vunpack.c.l.bf16 %v1844
        %v1865 = vunpack.c.l.bf16 %v1845
        %v1866 = vunpack.c.l.bf16 %v1846
        %v1867 = vunpack.c.l.bf16 %v1847
        %v1868 = vunpack.c.l.bf16 %v1848
        %v1869 = vunpack.c.l.bf16 %v1849
        %v1870 = vunpack.c.l.bf16 %v1850
        %v1871 = vunpack.c.l.bf16 %v1851
        %v1872 = vunpack.c.l.bf16 %v1852
        %v1873 = vunpack.c.l.bf16 %v1853
        %v1874 = vunpack.c.l.bf16 %v1854
        %v1875 = vunpack.c.l.bf16 %v1858
        %v1876 = vmul.f32 %v1859, %v1875
        %v1877 = vmul.f32 %v1501, %v1875
        %v1878 = vmul.f32 %v1860, %v1875
        %v1879 = vmul.f32 %v1861, %v1875
        %v1880 = vmul.f32 %v1504, %v1875
        %v1881 = vmul.f32 %v1862, %v1875
        %v1882 = vmul.f32 %v1863, %v1875
        %v1883 = vmul.f32 %v1507, %v1875
        %v1884 = vmul.f32 %v1864, %v1875
        %v1885 = vmul.f32 %v1865, %v1875
        %v1886 = vmul.f32 %v1510, %v1875
        %v1887 = vmul.f32 %v1866, %v1875
        %v1888 = vmul.f32 %v1867, %v1875
        %v1889 = vmul.f32 %v1513, %v1875
        %v1890 = vmul.f32 %v1868, %v1875
        %v1891 = vmul.f32 %v1869, %v1875
        %v1892 = vmul.f32 %v1516, %v1875
        %v1893 = vmul.f32 %v1870, %v1875
        %v1894 = vmul.f32 %v1871, %v1875
        %v1895 = vmul.f32 %v1519, %v1875
        %v1896 = vmul.f32 %v1872, %v1875
        %v1897 = vmul.f32 %v1873, %v1875
        %v1898 = vmul.f32 %v1522, %v1875
        %v1899 = vmul.f32 %v1874, %v1875
        %v1900 = vpack.c.bf16 %v1876, %v1876
        %v1901 = vpack.c.bf16 %v1877, %v1877
        %v1902 = vpack.c.bf16 %v1878, %v1878
        %v1903 = vpack.c.bf16 %v1879, %v1879
        %v1904 = vpack.c.bf16 %v1880, %v1880
        %v1905 = vpack.c.bf16 %v1881, %v1881
        %v1906 = vpack.c.bf16 %v1882, %v1882
        %v1907 = vpack.c.bf16 %v1883, %v1883
        %v1908 = vpack.c.bf16 %v1884, %v1884
        %v1909 = vpack.c.bf16 %v1885, %v1885
        %v1910 = vpack.c.bf16 %v1886, %v1886
        %v1911 = vpack.c.bf16 %v1887, %v1887
        %v1912 = vpack.c.bf16 %v1888, %v1888
        %v1913 = vpack.c.bf16 %v1889, %v1889
        %v1914 = vpack.c.bf16 %v1890, %v1890
        %v1915 = vpack.c.bf16 %v1891, %v1891
        %v1916 = vpack.c.bf16 %v1892, %v1892
        %v1917 = vpack.c.bf16 %v1893, %v1893
        %v1918 = vpack.c.bf16 %v1894, %v1894
        %v1919 = vpack.c.bf16 %v1895, %v1895
        %v1920 = vpack.c.bf16 %v1896, %v1896
        %v1921 = vpack.c.bf16 %v1897, %v1897
        %v1922 = vpack.c.bf16 %v1898, %v1898
        %v1923 = vpack.c.bf16 %v1899, %v1899
        %v1924 = vunpack.c.l.bf16 %v1900
        %v1925 = vunpack.c.l.bf16 %v1901
        %v1926 = vunpack.c.l.bf16 %v1902
        %v1927 = vunpack.c.l.bf16 %v1903
        %v1928 = vunpack.c.l.bf16 %v1904
        %v1929 = vunpack.c.l.bf16 %v1905
        %v1930 = vunpack.c.l.bf16 %v1906
        %v1931 = vunpack.c.l.bf16 %v1907
        %v1932 = vunpack.c.l.bf16 %v1908
        %v1933 = vunpack.c.l.bf16 %v1909
        %v1934 = vunpack.c.l.bf16 %v1910
        %v1935 = vunpack.c.l.bf16 %v1911
        %v1936 = vunpack.c.l.bf16 %v1912
        %v1937 = vunpack.c.l.bf16 %v1913
        %v1938 = vunpack.c.l.bf16 %v1914
        %v1939 = vunpack.c.l.bf16 %v1915
        %v1940 = vunpack.c.l.bf16 %v1916
        %v1941 = vunpack.c.l.bf16 %v1917
        %v1942 = vunpack.c.l.bf16 %v1918
        %v1943 = vunpack.c.l.bf16 %v1919
        %v1944 = vunpack.c.l.bf16 %v1920
        %v1945 = vunpack.c.l.bf16 %v1921
        %v1946 = vunpack.c.l.bf16 %v1922
        %v1947 = vunpack.c.l.bf16 %v1923
        %v1972 = vrot.slane %v1924, 4
        %v1973 = vrot.slane %v1925, 4
        %v1974 = vsel %vm802, %v1972, %v1973
        %v1975 = vrot.slane %v1926, 4
        %v1976 = vsel %vm802, %v1973, %v1975
        %v1977 = vrot.slane %v1927, 4
        %v1978 = vrot.slane %v1928, 4
        %v1979 = vsel %vm802, %v1977, %v1978
        %v1980 = vrot.slane %v1929, 4
        %v1981 = vsel %vm802, %v1978, %v1980
        %v1982 = vrot.slane %v1930, 4
        %v1983 = vrot.slane %v1931, 4
        %v1984 = vsel %vm802, %v1982, %v1983
        %v1985 = vrot.slane %v1932, 4
        %v1986 = vsel %vm802, %v1983, %v1985
        %v1987 = vrot.slane %v1933, 4
        %v1988 = vrot.slane %v1934, 4
        %v1989 = vsel %vm802, %v1987, %v1988
        %v1990 = vrot.slane %v1935, 4
        %v1991 = vsel %vm802, %v1988, %v1990
        %v1992 = vrot.slane %v1936, 4
        %v1993 = vrot.slane %v1937, 4
        %v1994 = vsel %vm802, %v1992, %v1993
        %v1995 = vrot.slane %v1938, 4
        %v1996 = vsel %vm802, %v1993, %v1995
        %v1997 = vrot.slane %v1939, 4
        %v1998 = vrot.slane %v1940, 4
        %v1999 = vsel %vm802, %v1997, %v1998
        %v2000 = vrot.slane %v1941, 4
        %v2001 = vsel %vm802, %v1998, %v2000
        %v2002 = vrot.slane %v1942, 4
        %v2003 = vrot.slane %v1943, 4
        %v2004 = vsel %vm802, %v2002, %v2003
        %v2005 = vrot.slane %v1944, 4
        %v2006 = vsel %vm802, %v2003, %v2005
        %v2007 = vrot.slane %v1945, 4
        %v2008 = vrot.slane %v1946, 4
        %v2009 = vsel %vm802, %v2007, %v2008
        %v2010 = vrot.slane %v1947, 4
        %v2011 = vsel %vm802, %v2008, %v2010
        %v2036 = vadd.f32 %v1815, %v1974
        %v2037 = vadd.f32 %v1816, %v1976
        %v2038 = vadd.f32 %v1817, %v1975
        %v2039 = vadd.f32 %v1818, %v1979
        %v2040 = vadd.f32 %v1819, %v1981
        %v2041 = vadd.f32 %v1820, %v1980
        %v2042 = vadd.f32 %v1821, %v1984
        %v2043 = vadd.f32 %v1822, %v1986
        %v2044 = vadd.f32 %v1823, %v1985
        %v2045 = vadd.f32 %v1824, %v1989
        %v2046 = vadd.f32 %v1825, %v1991
        %v2047 = vadd.f32 %v1826, %v1990
        %v2048 = vadd.f32 %v1827, %v1994
        %v2049 = vadd.f32 %v1828, %v1996
        %v2050 = vadd.f32 %v1829, %v1995
        %v2051 = vadd.f32 %v1830, %v1999
        %v2052 = vadd.f32 %v1831, %v2001
        %v2053 = vadd.f32 %v1832, %v2000
        %v2054 = vadd.f32 %v1833, %v2004
        %v2055 = vadd.f32 %v1834, %v2006
        %v2056 = vadd.f32 %v1835, %v2005
        %v2057 = vadd.f32 %v1836, %v2009
        %v2058 = vadd.f32 %v1837, %v2011
        %v2059 = vadd.f32 %v1838, %v2010
        %v2060 = vld [vmem:[%s305] sm:$0x1]
        %v2062 = vperm.slane %v2060, 0
        %v2064 = vmul.f32 %v2036, %v2062
        %v2065 = vmul.f32 %v2037, %v2062
        %v2066 = vmul.f32 %v2038, %v2062
        %v2067 = vmul.f32 %v2039, %v2062
        %v2068 = vmul.f32 %v2040, %v2062
        %v2069 = vmul.f32 %v2041, %v2062
        %v2070 = vmul.f32 %v2042, %v2062
        %v2071 = vmul.f32 %v2043, %v2062
        %v2072 = vmul.f32 %v2044, %v2062
        %v2073 = vmul.f32 %v2045, %v2062
        %v2074 = vmul.f32 %v2046, %v2062
        %v2075 = vmul.f32 %v2047, %v2062
        %v2076 = vmul.f32 %v2048, %v2062
        %v2077 = vmul.f32 %v2049, %v2062
        %v2078 = vmul.f32 %v2050, %v2062
        %v2079 = vmul.f32 %v2051, %v2062
        %v2080 = vmul.f32 %v2052, %v2062
        %v2081 = vmul.f32 %v2053, %v2062
        %v2082 = vmul.f32 %v2054, %v2062
        %v2083 = vmul.f32 %v2055, %v2062
        %v2084 = vmul.f32 %v2056, %v2062
        %v2085 = vmul.f32 %v2057, %v2062
        %v2086 = vmul.f32 %v2058, %v2062
        %v2087 = vmul.f32 %v2059, %v2062
        %v2088 = vld [vmem:[%s308] sm:$0x1]
        %v2090 = vperm.slane %v2088, 0
        %v2092 = vadd.f32 %v2064, %v2090
        %v2093 = vadd.f32 %v2065, %v2090
        %v2094 = vadd.f32 %v2066, %v2090
        %v2095 = vadd.f32 %v2067, %v2090
        %v2096 = vadd.f32 %v2068, %v2090
        %v2097 = vadd.f32 %v2069, %v2090
        %v2098 = vadd.f32 %v2070, %v2090
        %v2099 = vadd.f32 %v2071, %v2090
        %v2100 = vadd.f32 %v2072, %v2090
        %v2101 = vadd.f32 %v2073, %v2090
        %v2102 = vadd.f32 %v2074, %v2090
        %v2103 = vadd.f32 %v2075, %v2090
        %v2104 = vadd.f32 %v2076, %v2090
        %v2105 = vadd.f32 %v2077, %v2090
        %v2106 = vadd.f32 %v2078, %v2090
        %v2107 = vadd.f32 %v2079, %v2090
        %v2108 = vadd.f32 %v2080, %v2090
        %v2109 = vadd.f32 %v2081, %v2090
        %v2110 = vadd.f32 %v2082, %v2090
        %v2111 = vadd.f32 %v2083, %v2090
        %v2112 = vadd.f32 %v2084, %v2090
        %v2113 = vadd.f32 %v2085, %v2090
        %v2114 = vadd.f32 %v2086, %v2090
        %v2115 = vadd.f32 %v2087, %v2090
        %v2116 = vadd.f32 %v2092, 3.0
        %v2117 = vadd.f32 %v2093, 3.0
        %v2118 = vadd.f32 %v2094, 3.0
        %v2119 = vadd.f32 %v2095, 3.0
        %v2120 = vadd.f32 %v2096, 3.0
        %v2121 = vadd.f32 %v2097, 3.0
        %v2122 = vadd.f32 %v2098, 3.0
        %v2123 = vadd.f32 %v2099, 3.0
        %v2124 = vadd.f32 %v2100, 3.0
        %v2125 = vadd.f32 %v2101, 3.0
        %v2126 = vadd.f32 %v2102, 3.0
        %v2127 = vadd.f32 %v2103, 3.0
        %v2128 = vadd.f32 %v2104, 3.0
        %v2129 = vadd.f32 %v2105, 3.0
        %v2130 = vadd.f32 %v2106, 3.0
        %v2131 = vadd.f32 %v2107, 3.0
        %v2132 = vadd.f32 %v2108, 3.0
        %v2133 = vadd.f32 %v2109, 3.0
        %v2134 = vadd.f32 %v2110, 3.0
        %v2135 = vadd.f32 %v2111, 3.0
        %v2136 = vadd.f32 %v2112, 3.0
        %v2137 = vadd.f32 %v2113, 3.0
        %v2138 = vadd.f32 %v2114, 3.0
        %v2139 = vadd.f32 %v2115, 3.0
        %v2140 = vmax.f32 %v2116, 0.0
        %v2141 = vmax.f32 %v2117, 0.0
        %v2142 = vmax.f32 %v2118, 0.0
        %v2143 = vmax.f32 %v2119, 0.0
        %v2144 = vmax.f32 %v2120, 0.0
        %v2145 = vmax.f32 %v2121, 0.0
        %v2146 = vmax.f32 %v2122, 0.0
        %v2147 = vmax.f32 %v2123, 0.0
        %v2148 = vmax.f32 %v2124, 0.0
        %v2149 = vmax.f32 %v2125, 0.0
        %v2150 = vmax.f32 %v2126, 0.0
        %v2151 = vmax.f32 %v2127, 0.0
        %v2152 = vmax.f32 %v2128, 0.0
        %v2153 = vmax.f32 %v2129, 0.0
        %v2154 = vmax.f32 %v2130, 0.0
        %v2155 = vmax.f32 %v2131, 0.0
        %v2156 = vmax.f32 %v2132, 0.0
        %v2157 = vmax.f32 %v2133, 0.0
        %v2158 = vmax.f32 %v2134, 0.0
        %v2159 = vmax.f32 %v2135, 0.0
        %v2160 = vmax.f32 %v2136, 0.0
        %v2161 = vmax.f32 %v2137, 0.0
        %v2162 = vmax.f32 %v2138, 0.0
        %v2163 = vmax.f32 %v2139, 0.0
        %v2164 = vmin.f32 %v2140, 6.0
        %v2165 = vmin.f32 %v2141, 6.0
        %v2166 = vmin.f32 %v2142, 6.0
        %v2167 = vmin.f32 %v2143, 6.0
        %v2168 = vmin.f32 %v2144, 6.0
        %v2169 = vmin.f32 %v2145, 6.0
        %v2170 = vmin.f32 %v2146, 6.0
        %v2171 = vmin.f32 %v2147, 6.0
        %v2172 = vmin.f32 %v2148, 6.0
        %v2173 = vmin.f32 %v2149, 6.0
        %v2174 = vmin.f32 %v2150, 6.0
        %v2175 = vmin.f32 %v2151, 6.0
        %v2176 = vmin.f32 %v2152, 6.0
        %v2177 = vmin.f32 %v2153, 6.0
        %v2178 = vmin.f32 %v2154, 6.0
        %v2179 = vmin.f32 %v2155, 6.0
        %v2180 = vmin.f32 %v2156, 6.0
        %v2181 = vmin.f32 %v2157, 6.0
        %v2182 = vmin.f32 %v2158, 6.0
        %v2183 = vmin.f32 %v2159, 6.0
        %v2184 = vmin.f32 %v2160, 6.0
        %v2185 = vmin.f32 %v2161, 6.0
        %v2186 = vmin.f32 %v2162, 6.0
        %v2187 = vmin.f32 %v2163, 6.0
        %v2188 = vmul.f32 %v2164, 0.16666667
        %v2189 = vmul.f32 %v2165, 0.16666667
        %v2190 = vmul.f32 %v2166, 0.16666667
        %v2191 = vmul.f32 %v2167, 0.16666667
        %v2192 = vmul.f32 %v2168, 0.16666667
        %v2193 = vmul.f32 %v2169, 0.16666667
        %v2194 = vmul.f32 %v2170, 0.16666667
        %v2195 = vmul.f32 %v2171, 0.16666667
        %v2196 = vmul.f32 %v2172, 0.16666667
        %v2197 = vmul.f32 %v2173, 0.16666667
        %v2198 = vmul.f32 %v2174, 0.16666667
        %v2199 = vmul.f32 %v2175, 0.16666667
        %v2200 = vmul.f32 %v2176, 0.16666667
        %v2201 = vmul.f32 %v2177, 0.16666667
        %v2202 = vmul.f32 %v2178, 0.16666667
        %v2203 = vmul.f32 %v2179, 0.16666667
        %v2204 = vmul.f32 %v2180, 0.16666667
        %v2205 = vmul.f32 %v2181, 0.16666667
        %v2206 = vmul.f32 %v2182, 0.16666667
        %v2207 = vmul.f32 %v2183, 0.16666667
        %v2208 = vmul.f32 %v2184, 0.16666667
        %v2209 = vmul.f32 %v2185, 0.16666667
        %v2210 = vmul.f32 %v2186, 0.16666667
        %v2211 = vmul.f32 %v2187, 0.16666667
        %v2212 = vmul.f32 %v2092, %v2188
        %v2213 = vmul.f32 %v2093, %v2189
        %v2214 = vmul.f32 %v2094, %v2190
        %v2215 = vmul.f32 %v2095, %v2191
        %v2216 = vmul.f32 %v2096, %v2192
        %v2217 = vmul.f32 %v2097, %v2193
        %v2218 = vmul.f32 %v2098, %v2194
        %v2219 = vmul.f32 %v2099, %v2195
        %v2220 = vmul.f32 %v2100, %v2196
        %v2221 = vmul.f32 %v2101, %v2197
        %v2222 = vmul.f32 %v2102, %v2198
        %v2223 = vmul.f32 %v2103, %v2199
        %v2224 = vmul.f32 %v2104, %v2200
        %v2225 = vmul.f32 %v2105, %v2201
        %v2226 = vmul.f32 %v2106, %v2202
        %v2227 = vmul.f32 %v2107, %v2203
        %v2228 = vmul.f32 %v2108, %v2204
        %v2229 = vmul.f32 %v2109, %v2205
        %v2230 = vmul.f32 %v2110, %v2206
        %v2231 = vmul.f32 %v2111, %v2207
        %v2232 = vmul.f32 %v2112, %v2208
        %v2233 = vmul.f32 %v2113, %v2209
        %v2234 = vmul.f32 %v2114, %v2210
        %v2235 = vmul.f32 %v2115, %v2211
        %v2236 = vpack.c.bf16 %v2212, %v2212
        %v2237 = vpack.c.bf16 %v2213, %v2213
        %v2238 = vpack.c.bf16 %v2214, %v2214
        %v2239 = vpack.c.bf16 %v2215, %v2215
        %v2240 = vpack.c.bf16 %v2216, %v2216
        %v2241 = vpack.c.bf16 %v2217, %v2217
        %v2242 = vpack.c.bf16 %v2218, %v2218
        %v2243 = vpack.c.bf16 %v2219, %v2219
        %v2244 = vpack.c.bf16 %v2220, %v2220
        %v2245 = vpack.c.bf16 %v2221, %v2221
        %v2246 = vpack.c.bf16 %v2222, %v2222
        %v2247 = vpack.c.bf16 %v2223, %v2223
        %v2248 = vpack.c.bf16 %v2224, %v2224
        %v2249 = vpack.c.bf16 %v2225, %v2225
        %v2250 = vpack.c.bf16 %v2226, %v2226
        %v2251 = vpack.c.bf16 %v2227, %v2227
        %v2252 = vpack.c.bf16 %v2228, %v2228
        %v2253 = vpack.c.bf16 %v2229, %v2229
        %v2254 = vpack.c.bf16 %v2230, %v2230
        %v2255 = vpack.c.bf16 %v2231, %v2231
        %v2256 = vpack.c.bf16 %v2232, %v2232
        %v2257 = vpack.c.bf16 %v2233, %v2233
        %v2258 = vpack.c.bf16 %v2234, %v2234
        %v2259 = vpack.c.bf16 %v2235, %v2235
        %2260 = vst [vmem:[%s321] sm:$0xf] %v2236
        %2261 = vst [vmem:[%s321 + $0x4] sm:$0xf] %v2237
        %2262 = vst [vmem:[%s321 + $0x8] sm:$0x3] %v2238
        %2263 = vst [vmem:[%s321 + $0xc] sm:$0xf] %v2239
        %2264 = vst [vmem:[%s321 + $0x10] sm:$0xf] %v2240
        %2265 = vst [vmem:[%s321 + $0x14] sm:$0x3] %v2241
        %2266 = vst [vmem:[%s321 + $0x18] sm:$0xf] %v2242
        %2267 = vst [vmem:[%s321 + $0x1c] sm:$0xf] %v2243
        %2268 = vst [vmem:[%s321 + $0x20] sm:$0x3] %v2244
        %2269 = vst [vmem:[%s321 + $0x24] sm:$0xf] %v2245
        %2270 = vst [vmem:[%s321 + $0x28] sm:$0xf] %v2246
        %2271 = vst [vmem:[%s321 + $0x2c] sm:$0x3] %v2247
        %2272 = vst [vmem:[%s321 + $0x30] sm:$0xf] %v2248
        %2273 = vst [vmem:[%s321 + $0x34] sm:$0xf] %v2249
        %2274 = vst [vmem:[%s321 + $0x38] sm:$0x3] %v2250
        %2275 = vst [vmem:[%s321 + $0x3c] sm:$0xf] %v2251
        %2276 = vst [vmem:[%s321 + $0x40] sm:$0xf] %v2252
        %2277 = vst [vmem:[%s321 + $0x44] sm:$0x3] %v2253
        %2278 = vst [vmem:[%s321 + $0x48] sm:$0xf] %v2254
        %2279 = vst [vmem:[%s321 + $0x4c] sm:$0xf] %v2255
        %2280 = vst [vmem:[%s321 + $0x50] sm:$0x3] %v2256
        %2281 = vst [vmem:[%s321 + $0x54] sm:$0xf] %v2257
        %2282 = vst [vmem:[%s321 + $0x58] sm:$0xf] %v2258
        %2283 = vst [vmem:[%s321 + $0x5c] sm:$0x3] %v2259
        %s2284 = smul.u32 8, %s25
        %p2285 = scmp.lt.s32.totalorder %s24, 1
        %s2286 = scalar_select %p2285, %s24, 1
        %p2287 = scmp.lt.s32.totalorder %s2284, 23
        %s2288 = scalar_select %p2287, %s2284, 23
        %p2289 = scmp.lt.s32.totalorder %s26, 0
        %s2290 = scalar_select %p2289, %s26, 0
        %s2291 = smul.addr %s2288, 3
        %s2292 = sadd.s32 %s2290, %s2291
        %s2293 = smul.addr %s2286, 72
        %s2294 = sadd.s32 %s2292, %s2293
        %s2295 = smul.addr %s2294, 4
        %s2296 = scalar_lea.vmem %s4, %s2295
        // Predicated region
        $region45: #{tpu_custom_call.1} parent=35 // pred_check
          %p2297 = pneg %p170
        $region46: #{tpu_custom_call.1} parent=35 // pred_check_branch
          %2299 = sbr.rel (%p2297) target = $region48
        $region47: #{tpu_custom_call.1} parent=35 // pred_region
          %s2300 = smul.u32 8, %s25
        $region48: #{tpu_custom_call.1} parent=35 // pred_fallthru
          _
      $region36: #{tpu_custom_call.1} parent=5 // pred_fallthru
        _
      %p2301 = scmp.le.s32.totalorder 2, %s14
      // Predicated region
      $region49: #{tpu_custom_call.1} parent=5 // pred_check
        %p2302 = pneg %p2301
      $region50: #{tpu_custom_call.1} parent=5 // pred_check_branch
        %2304 = sbr.rel (%p2302) target = $region52
      $region51: #{tpu_custom_call.1} parent=5 // pred_region
        %s2305 = ssub.s32 %s14, 2
        // Predicated region
        $region53: #{tpu_custom_call.1} parent=51 // pred_check
          %p2306 = pneg %p176
        $region54: #{tpu_custom_call.1} parent=51 // pred_check_branch
          %2308 = sbr.rel (%p2306) target = $region56
        $region55: #{tpu_custom_call.1} parent=51 // pred_region
          %s2309 = smul.u32 8, %s28
          %p2310 = scmp.lt.s32.totalorder %s27, 1
          %s2311 = scalar_select %p2310, %s27, 1
          %p2312 = scmp.lt.s32.totalorder %s2309, 23
          %s2313 = scalar_select %p2312, %s2309, 23
          %p2314 = scmp.lt.s32.totalorder %s29, 0
          %s2315 = scalar_select %p2314, %s29, 0
          %s2316 = smul.addr %s2313, 3
          %s2317 = sadd.s32 %s2315, %s2316
          %s2318 = smul.addr %s2311, 72
          %s2319 = sadd.s32 %s2317, %s2318
          %s2320 = smul.addr %s2319, 4
          %s2321 = scalar_lea.vmem %s4, %s2320
        $region56: #{tpu_custom_call.1} parent=51 // pred_fallthru
          _
      $region52: #{tpu_custom_call.1} parent=5 // pred_fallthru
        _
    $region6: #{tpu_custom_call.1} parent=1 // loop_footer
      %s18 = sadd.s32 1, %s14
    $region7: #{tpu_custom_call.1} parent=1 // loop_footer_branch
      %13 = sbr.rel target = $region3
    $region8: #{tpu_custom_call.1} parent=1 // loop_exit
      _
    %2322 = vsyncpa [#allocation3], 1
    %s2323 = scalar_lea.sflag [#allocation3], 1
    %2324 = vsyncpa %s2323, 1
    %2325 = vsyncpa [#allocation5], 1

</llo_original>
